<compile_context>
chip_gen: v7x
topology: tpu7x:2x2x1
jax: 0.10.0
libtpu: 0.0.40
codegen_flags: <defaults>
</compile_context>

<pallas_src>
import functools

import jax
import jax.numpy as jnp
from jax.experimental import pallas as pl
from jax.experimental.pallas import tpu as pltpu


def _round_up(v, m):
    return (v + m - 1) // m * m


# ----------------------------------------------------------------------------
# Fused kernel
# ----------------------------------------------------------------------------
def gin_fused_kernel(adj_ref, x_ref, w1_ref, b1_ref, w2_ref, b2_ref,
                     pool_ref, wh_ref, bh_ref, out_ref, h_ref):
    l = pl.program_id(0)          # layer index            (outer, sequential)
    r = pl.program_id(1)          # adjacency row tile     (inner, sequential)
    n_layers = pl.num_programs(0)
    n_rows = pl.num_programs(1)
    tm = adj_ref.shape[0]

    slot_in = l % 2               # ping-pong feature buffer slots
    slot_out = (l + 1) % 2

    # First grid step: seed the ping-pong buffer with the (zero-padded) inputs.
    @pl.when(jnp.logical_and(l == 0, r == 0))
    def _():
        h_ref[0] = x_ref[...]

    h_in = h_ref.at[slot_in]      # [N_pad, H_pad] features from previous layer
    h_out = h_ref.at[slot_out]

    # GIN aggregation for this row block:  z = (1 + eps) * h + A_rows @ h
    # (eps = 0).  adj is bf16 (exact for integer edge counts); the dot promotes
    # to f32, accumulation is f32.
    agg = jnp.dot(adj_ref[...], h_in[...], preferred_element_type=jnp.float32)
    row = pl.multiple_of(r * tm, tm)
    z = h_in[pl.ds(row, tm), :] + agg

    # MLP: Linear -> ReLU -> Linear, then the outer F.relu from GIN.forward.
    z = jnp.dot(z, w1_ref[0], preferred_element_type=jnp.float32) + b1_ref[0]
    z = jnp.maximum(z, 0.0)
    z = jnp.dot(z, w2_ref[0], preferred_element_type=jnp.float32) + b2_ref[0]
    z = jnp.maximum(z, 0.0)
    h_out[pl.ds(row, tm), :] = z

    # Final grid step: global mean pool + fused (mem | time) heads.
    # Head weights are concatenated along the lane axis and padded to 128 so
    # the result is written with a single lane-dense store.
    @pl.when(jnp.logical_and(l == n_layers - 1, r == n_rows - 1))
    def _():
        pooled = jnp.dot(pool_ref[...], h_out[...],
                         preferred_element_type=jnp.float32)
        out_ref[...] = (jnp.dot(pooled, wh_ref[...],
                                preferred_element_type=jnp.float32)
                        + bh_ref[...])


# ----------------------------------------------------------------------------
# Host-side wrapper
# ----------------------------------------------------------------------------
def gin_forward(params, x, edge_index, batch, *, num_graphs, num_layers):
    """x: [N, F_in] f32, edge_index: [2, E] i32, batch: [N] i32."""
    n, f_in = x.shape
    hidden = params["c1_w2"].shape[1]
    out_c = params["lm_w"].shape[1]
    f32 = jnp.float32

    # ---- padded sizes (lane-dense, MXU friendly) ----------------------------
    h_pad = _round_up(max(hidden, f_in), 128)
    n_pad = _round_up(n, 128)
    if n_pad <= 512:
        tm = n_pad                      # single adjacency row tile
    else:
        tm = 512                        # stream adjacency through VMEM
        n_pad = _round_up(n_pad, tm)
    b_pad = _round_up(num_graphs, 8)
    out_pad = _round_up(2 * out_c, 128)  # [mem | time | zero pad]

    # ---- dense adjacency A[i, j] = #edges j -> i, stored in bf16 ------------
    src, dst = edge_index[0], edge_index[1]
    adj = (jnp.zeros((n_pad, n_pad), f32).at[dst, src].add(1.0)
           ).astype(jnp.bfloat16)

    # ---- padded node features ------------------------------------------------
    x_pad = jnp.zeros((n_pad, h_pad), f32).at[:n, :f_in].set(x)

    # ---- mean-pool matrix P [B_pad, N_pad] -----------------------------------
    one_hot = (batch[None, :] == jnp.arange(num_graphs)[:, None]).astype(f32)
    counts = jnp.maximum(one_hot.sum(axis=1, keepdims=True), 1.0)
    pool = (jnp.zeros((b_pad, n_pad), f32)
            .at[:num_graphs, :n].set(one_hot / counts))

    # ---- per-layer MLP weight stacks (layer 0 = conv1, rest share conv2) ----
    def pad_w(w):
        return jnp.zeros((h_pad, h_pad), f32).at[:w.shape[0], :w.shape[1]].set(w)

    def pad_b(b):
        return jnp.zeros((1, h_pad), f32).at[:, :b.shape[1]].set(b)

    w1_stack = jnp.stack([pad_w(params["c1_w1"])]
                         + [pad_w(params["c2_w1"])] * (num_layers - 1))
    b1_stack = jnp.stack([pad_b(params["c1_b1"])]
                         + [pad_b(params["c2_b1"])] * (num_layers - 1))
    w2_stack = jnp.stack([pad_w(params["c1_w2"])]
                         + [pad_w(params["c2_w2"])] * (num_layers - 1))
    b2_stack = jnp.stack([pad_b(params["c1_b2"])]
                         + [pad_b(params["c2_b2"])] * (num_layers - 1))

    # ---- fused head weights:  [H_pad, out_pad] = [mem | time | 0...] --------
    wh = (jnp.zeros((h_pad, out_pad), f32)
          .at[:hidden, :out_c].set(params["lm_w"])
          .at[:hidden, out_c:2 * out_c].set(params["lt_w"]))
    bh = (jnp.zeros((1, out_pad), f32)
          .at[:, :out_c].set(params["lm_b"])
          .at[:, out_c:2 * out_c].set(params["lt_b"]))

    # ---- fused pallas call ----------------------------------------------------
    grid = (num_layers, n_pad // tm)

    vmem_bytes = (2 * tm * n_pad * 2            # adj tile, bf16, double-buffered
                  + 2 * n_pad * h_pad * 4       # x block
                  + 2 * n_pad * h_pad * 4       # h ping-pong scratch
                  + 8 * h_pad * h_pad * 4       # w1/w2 blocks (double-buffered)
                  + 2 * b_pad * n_pad * 4       # pool matrix
                  + 2 * h_pad * out_pad * 4     # head weights
                  + 2 * b_pad * out_pad * 4)    # output block
    vmem_limit = int(min(max(2 * vmem_bytes, 8 * 1024 * 1024),
                         48 * 1024 * 1024))     # stay under v7x 64 MiB VMEM

    out = pl.pallas_call(
        gin_fused_kernel,
        out_shape=jax.ShapeDtypeStruct((b_pad, out_pad), f32),
        grid_spec=pltpu.PrefetchScalarGridSpec(
            num_scalar_prefetch=0,
            grid=grid,
            in_specs=[
                pl.BlockSpec((tm, n_pad), lambda l, r: (r, 0)),           # adj
                pl.BlockSpec((n_pad, h_pad), lambda l, r: (0, 0)),        # x
                pl.BlockSpec((1, h_pad, h_pad), lambda l, r: (l, 0, 0)),  # w1
                pl.BlockSpec((1, 1, h_pad), lambda l, r: (l, 0, 0)),      # b1
                pl.BlockSpec((1, h_pad, h_pad), lambda l, r: (l, 0, 0)),  # w2
                pl.BlockSpec((1, 1, h_pad), lambda l, r: (l, 0, 0)),      # b2
                pl.BlockSpec((b_pad, n_pad), lambda l, r: (0, 0)),        # pool
                pl.BlockSpec((h_pad, out_pad), lambda l, r: (0, 0)),      # wh
                pl.BlockSpec((1, out_pad), lambda l, r: (0, 0)),          # bh
            ],
            out_specs=pl.BlockSpec((b_pad, out_pad), lambda l, r: (0, 0)),
            scratch_shapes=[pltpu.VMEM((2, n_pad, h_pad), f32)],
        ),
        compiler_params=pltpu.CompilerParams(
            # Both axes carry state through the VMEM scratch buffer, so they
            # must remain sequential on a single TensorCore.
            dimension_semantics=("arbitrary", "arbitrary"),
            vmem_limit_bytes=vmem_limit,
        ),
    )(adj, x_pad, w1_stack, b1_stack, w2_stack, b2_stack, pool, wh, bh)

    mem_pred = out[:num_graphs, :out_c]
    time_pred = out[:num_graphs, out_c:2 * out_c]
    return jnp.squeeze(mem_pred), jnp.squeeze(time_pred)


# ----------------------------------------------------------------------------
# Parameters (synthetic, deterministic).  Linear weights stored as [in, out].
# ----------------------------------------------------------------------------
def init_gin_params(key, num_node_features, hidden_channels, out_channels):
    ks = jax.random.split(key, 6)
    scale = 0.1

    def lin(k, fin, fout):
        kw, kb = jax.random.split(k)
        w = scale * jax.random.normal(kw, (fin, fout), jnp.float32)
        b = scale * jax.random.normal(kb, (1, fout), jnp.float32)
        return w, b

    p = {}
    p["c1_w1"], p["c1_b1"] = lin(ks[0], num_node_features, hidden_channels)
    p["c1_w2"], p["c1_b2"] = lin(ks[1], hidden_channels, hidden_channels)
    p["c2_w1"], p["c2_b1"] = lin(ks[2], hidden_channels, hidden_channels)
    p["c2_w2"], p["c2_b2"] = lin(ks[3], hidden_channels, hidden_channels)
    p["lm_w"], p["lm_b"] = lin(ks[4], hidden_channels, out_channels)
    p["lt_w"], p["lt_b"] = lin(ks[5], hidden_channels, out_channels)
    return p


# ----------------------------------------------------------------------------
# Pure-JAX reference (mirrors the torch module) for a correctness check.
# ----------------------------------------------------------------------------
def gin_reference(params, x, edge_index, batch, num_graphs, num_layers):
    n = x.shape[0]
    src, dst = edge_index[0], edge_index[1]
    adj = jnp.zeros((n, n), jnp.float32).at[dst, src].add(1.0)

    def conv(h, w1, b1, w2, b2):
        z = h + adj @ h
        z = jnp.maximum(z @ w1 + b1, 0.0)
        z = jnp.maximum(z @ w2 + b2, 0.0)
        return z

    h = conv(x, params["c1_w1"], params["c1_b1"],
             params["c1_w2"], params["c1_b2"])
    for _ in range(num_layers - 1):
        h = conv(h, params["c2_w1"], params["c2_b1"],
                 params["c2_w2"], params["c2_b2"])

    one_hot = (batch[None, :] == jnp.arange(num_graphs)[:, None]).astype(jnp.float32)
    counts = jnp.maximum(one_hot.sum(axis=1, keepdims=True), 1.0)
    pooled = (one_hot / counts) @ h
    mem = pooled @ params["lm_w"] + params["lm_b"]
    time = pooled @ params["lt_w"] + params["lt_b"]
    return jnp.squeeze(mem), jnp.squeeze(time)


# ----------------------------------------------------------------------------
if __name__ == "__main__":
    key = jax.random.PRNGKey(0)

    num_node_features = 4
    hidden_channels = 32
    out_channels = 1
    num_layers = 3
    dropout = 0.0  # unused in the reference forward

    # two small chain graphs of 8 nodes each (undirected edges)
    n_per_graph = 8
    num_graphs = 2
    n = n_per_graph * num_graphs

    k_x, k_p = jax.random.split(key)
    x = jax.random.normal(k_x, (n, num_node_features), jnp.float32)

    edges = []
    for g in range(num_graphs):
        off = g * n_per_graph
        for i in range(n_per_graph - 1):
            edges.append((off + i, off + i + 1))
            edges.append((off + i + 1, off + i))
    edge_index = jnp.array(edges, jnp.int32).T            # [2, E]
    batch = jnp.repeat(jnp.arange(num_graphs, dtype=jnp.int32), n_per_graph)

    params = init_gin_params(k_p, num_node_features, hidden_channels, out_channels)

    fwd = jax.jit(functools.partial(gin_forward,
                                    num_graphs=num_graphs,
                                    num_layers=num_layers))
    mem_pred, time_pred = fwd(params, x, edge_index, batch)
    jax.block_until_ready((mem_pred, time_pred))

    assert mem_pred.shape == (num_graphs,)
    assert time_pred.shape == (num_graphs,)

    with jax.default_matmul_precision("float32"):
        mem_ref, time_ref = gin_reference(params, x, edge_index, batch,
                                          num_graphs, num_layers)
    assert jnp.allclose(mem_pred, mem_ref, atol=1e-2, rtol=1e-2), (mem_pred, mem_ref)
    assert jnp.allclose(time_pred, time_ref, atol=1e-2, rtol=1e-2), (time_pred, time_ref)

    print("KERNEL_OK")
</pallas_src>

<mosaic_0001>
module attributes {stable_mosaic.version = 11 : i64} {
  func.func @gin_fused_kernel(%arg0: i32, %arg1: i32, %arg2: memref<128x128xbf16, #tpu.memory_space<vmem>>, %arg3: memref<128x128xf32, #tpu.memory_space<vmem>>, %arg4: memref<1x128x128xf32, #tpu.memory_space<vmem>>, %arg5: memref<1x1x128xf32, #tpu.memory_space<vmem>>, %arg6: memref<1x128x128xf32, #tpu.memory_space<vmem>>, %arg7: memref<1x1x128xf32, #tpu.memory_space<vmem>>, %arg8: memref<8x128xf32, #tpu.memory_space<vmem>>, %arg9: memref<128x128xf32, #tpu.memory_space<vmem>>, %arg10: memref<1x128xf32, #tpu.memory_space<vmem>>, %arg11: memref<8x128xf32, #tpu.memory_space<vmem>>, %arg12: memref<2x128x128xf32, #tpu.memory_space<vmem>>) attributes {dimension_semantics = [#tpu.dimension_semantics<arbitrary>, #tpu.dimension_semantics<arbitrary>], iteration_bounds = array<i64: 3, 1>, scalar_prefetch = 0 : i64, scratch_operands = 1 : i64, tpu.core_type = #tpu.core_type<tc>, window_params = [{transform_indices = @transform_0, window_bounds = array<i64: 128, 128>}, {pipeline_mode = #tpu.pipeline_mode<synchronous>, transform_indices = @transform_1, window_bounds = array<i64: 128, 128>}, {transform_indices = @transform_2, window_bounds = array<i64: 1, 128, 128>}, {transform_indices = @transform_3, window_bounds = array<i64: 1, 1, 128>}, {transform_indices = @transform_4, window_bounds = array<i64: 1, 128, 128>}, {transform_indices = @transform_5, window_bounds = array<i64: 1, 1, 128>}, {pipeline_mode = #tpu.pipeline_mode<synchronous>, transform_indices = @transform_6, window_bounds = array<i64: 8, 128>}, {pipeline_mode = #tpu.pipeline_mode<synchronous>, transform_indices = @transform_7, window_bounds = array<i64: 128, 128>}, {pipeline_mode = #tpu.pipeline_mode<synchronous>, transform_indices = @transform_8, window_bounds = array<i64: 1, 128>}, {pipeline_mode = #tpu.pipeline_mode<synchronous>, transform_indices = @transform_9, window_bounds = array<i64: 8, 128>}]} {
    %c2_i32 = arith.constant 2 : i32
    %c0_i32 = arith.constant 0 : i32
    %0 = arith.cmpi eq, %c2_i32, %c0_i32 : i32
    %c1_i32 = arith.constant 1 : i32
    %1 = arith.select %0, %c1_i32, %c2_i32 : i32
    %2 = arith.remsi %arg0, %1 : i32
    %c0_i32_0 = arith.constant 0 : i32
    %3 = arith.cmpi ne, %2, %c0_i32_0 : i32
    %c0_i32_1 = arith.constant 0 : i32
    %4 = arith.cmpi slt, %2, %c0_i32_1 : i32
    %c0_i32_2 = arith.constant 0 : i32
    %5 = arith.cmpi slt, %1, %c0_i32_2 : i32
    %6 = arith.xori %4, %5 : i1
    %7 = arith.andi %6, %3 : i1
    %8 = arith.addi %2, %1 : i32
    %9 = arith.select %7, %8, %2 : i32
    %c1_i32_3 = arith.constant 1 : i32
    %10 = arith.addi %arg0, %c1_i32_3 : i32
    %c2_i32_4 = arith.constant 2 : i32
    %c0_i32_5 = arith.constant 0 : i32
    %11 = arith.cmpi eq, %c2_i32_4, %c0_i32_5 : i32
    %c1_i32_6 = arith.constant 1 : i32
    %12 = arith.select %11, %c1_i32_6, %c2_i32_4 : i32
    %13 = arith.remsi %10, %12 : i32
    %c0_i32_7 = arith.constant 0 : i32
    %14 = arith.cmpi ne, %13, %c0_i32_7 : i32
    %c0_i32_8 = arith.constant 0 : i32
    %15 = arith.cmpi slt, %13, %c0_i32_8 : i32
    %c0_i32_9 = arith.constant 0 : i32
    %16 = arith.cmpi slt, %12, %c0_i32_9 : i32
    %17 = arith.xori %15, %16 : i1
    %18 = arith.andi %17, %14 : i1
    %19 = arith.addi %13, %12 : i32
    %20 = arith.select %18, %19, %13 : i32
    %c0_i32_10 = arith.constant 0 : i32
    %21 = arith.cmpi eq, %arg0, %c0_i32_10 : i32
    %c0_i32_11 = arith.constant 0 : i32
    %22 = arith.cmpi eq, %arg1, %c0_i32_11 : i32
    %23 = arith.andi %21, %22 : i1
    %24 = arith.extui %23 : i1 to i32
    %c0_i32_12 = arith.constant 0 : i32
    %25 = arith.cmpi ne, %24, %c0_i32_12 : i32
    scf.if %25 {
      %c0_41 = arith.constant 0 : index
      %c0_42 = arith.constant 0 : index
      %65 = vector.load %arg3[%c0_41, %c0_42] : memref<128x128xf32, #tpu.memory_space<vmem>>, vector<128x128xf32>
      %c0_43 = arith.constant 0 : index
      %c0_44 = arith.constant 0 : index
      %c0_45 = arith.constant 0 : index
      %66 = vector.load %arg12[%c0_43, %c0_44, %c0_45] : memref<2x128x128xf32, #tpu.memory_space<vmem>>, vector<1x128x128xf32>
      %67 = vector.shape_cast %66 : vector<1x128x128xf32> to vector<128x128xf32>
      %68 = vector.shape_cast %65 : vector<128x128xf32> to vector<1x128x128xf32>
      tpu.vector_store %arg12[%c0_43, %c0_44, %c0_45], %68 {strides = array<i32>} : memref<2x128x128xf32, #tpu.memory_space<vmem>>, vector<1x128x128xf32>,
    } else {
    }
    %c0 = arith.constant 0 : index
    %c0_13 = arith.constant 0 : index
    %26 = vector.load %arg2[%c0, %c0_13] : memref<128x128xbf16, #tpu.memory_space<vmem>>, vector<128x128xbf16>
    %27 = arith.index_cast %9 : i32 to index
    %c0_14 = arith.constant 0 : index
    %c0_15 = arith.constant 0 : index
    %28 = vector.load %arg12[%27, %c0_14, %c0_15] : memref<2x128x128xf32, #tpu.memory_space<vmem>>, vector<1x128x128xf32>
    %29 = vector.shape_cast %28 : vector<1x128x128xf32> to vector<128x128xf32>
    %cst = arith.constant dense<0.000000e+00> : vector<128x128xf32>
    %30 = tpu.matmul %26, %29, %cst {dimension_numbers = #tpu.dot_dimension_numbers<[1], [0], [0], [1], [0, 0, 1, 1], [], []>} : vector<128x128xbf16>, vector<128x128xf32>, vector<128x128xf32> -> vector<128x128xf32>
    %c128_i32 = arith.constant 128 : i32
    %31 = arith.muli %arg1, %c128_i32 : i32
    %32 = tpu.assume_multiple %31, 128 : i32
    %c0_i32_16 = arith.constant 0 : i32
    %c0_i32_17 = arith.constant 0 : i32
    %33 = tpu.memref_slice %arg12[%9, %c0_i32_16, %c0_i32_17] : memref<2x128x128xf32, #tpu.memory_space<vmem>> -> memref<1x128x128xf32, #tpu.memory_space<vmem>>
    %34 = tpu.memref_squeeze %33 : memref<1x128x128xf32, #tpu.memory_space<vmem>> -> memref<128x128xf32, #tpu.memory_space<vmem>>
    %35 = arith.index_cast %32 : i32 to index
    %c0_18 = arith.constant 0 : index
    %36 = vector.load %34[%35, %c0_18] : memref<128x128xf32, #tpu.memory_space<vmem>>, vector<128x128xf32>
    %37 = arith.addf %36, %30 : vector<128x128xf32>
    %c0_19 = arith.constant 0 : index
    %c0_20 = arith.constant 0 : index
    %c0_21 = arith.constant 0 : index
    %38 = vector.load %arg4[%c0_19, %c0_20, %c0_21] : memref<1x128x128xf32, #tpu.memory_space<vmem>>, vector<1x128x128xf32>
    %39 = vector.shape_cast %38 : vector<1x128x128xf32> to vector<128x128xf32>
    %cst_22 = arith.constant dense<0.000000e+00> : vector<128x128xf32>
    %40 = tpu.matmul %37, %39, %cst_22 {dimension_numbers = #tpu.dot_dimension_numbers<[1], [0], [0], [1], [0, 0, 1, 1], [], []>} : vector<128x128xf32>, vector<128x128xf32>, vector<128x128xf32> -> vector<128x128xf32>
    %c0_23 = arith.constant 0 : index
    %c0_24 = arith.constant 0 : index
    %c0_25 = arith.constant 0 : index
    %41 = vector.load %arg5[%c0_23, %c0_24, %c0_25] : memref<1x1x128xf32, #tpu.memory_space<vmem>>, vector<1x1x128xf32>
    %42 = vector.shape_cast %41 : vector<1x1x128xf32> to vector<1x128xf32>
    %43 = vector.broadcast %42 : vector<1x128xf32> to vector<128x128xf32>
    %44 = arith.addf %40, %43 : vector<128x128xf32>
    %cst_26 = arith.constant 0.000000e+00 : f32
    %45 = vector.broadcast %cst_26 : f32 to vector<128x128xf32>
    %46 = arith.maximumf %44, %45 : vector<128x128xf32>
    %c0_27 = arith.constant 0 : index
    %c0_28 = arith.constant 0 : index
    %c0_29 = arith.constant 0 : index
    %47 = vector.load %arg6[%c0_27, %c0_28, %c0_29] : memref<1x128x128xf32, #tpu.memory_space<vmem>>, vector<1x128x128xf32>
    %48 = vector.shape_cast %47 : vector<1x128x128xf32> to vector<128x128xf32>
    %cst_30 = arith.constant dense<0.000000e+00> : vector<128x128xf32>
    %49 = tpu.matmul %46, %48, %cst_30 {dimension_numbers = #tpu.dot_dimension_numbers<[1], [0], [0], [1], [0, 0, 1, 1], [], []>} : vector<128x128xf32>, vector<128x128xf32>, vector<128x128xf32> -> vector<128x128xf32>
    %c0_31 = arith.constant 0 : index
    %c0_32 = arith.constant 0 : index
    %c0_33 = arith.constant 0 : index
    %50 = vector.load %arg7[%c0_31, %c0_32, %c0_33] : memref<1x1x128xf32, #tpu.memory_space<vmem>>, vector<1x1x128xf32>
    %51 = vector.shape_cast %50 : vector<1x1x128xf32> to vector<1x128xf32>
    %52 = vector.broadcast %51 : vector<1x128xf32> to vector<128x128xf32>
    %53 = arith.addf %49, %52 : vector<128x128xf32>
    %cst_34 = arith.constant 0.000000e+00 : f32
    %54 = vector.broadcast %cst_34 : f32 to vector<128x128xf32>
    %55 = arith.maximumf %53, %54 : vector<128x128xf32>
    %c0_i32_35 = arith.constant 0 : i32
    %c0_i32_36 = arith.constant 0 : i32
    %56 = tpu.memref_slice %arg12[%20, %c0_i32_35, %c0_i32_36] : memref<2x128x128xf32, #tpu.memory_space<vmem>> -> memref<1x128x128xf32, #tpu.memory_space<vmem>>
    %57 = tpu.memref_squeeze %56 : memref<1x128x128xf32, #tpu.memory_space<vmem>> -> memref<128x128xf32, #tpu.memory_space<vmem>>
    %58 = arith.index_cast %32 : i32 to index
    %c0_37 = arith.constant 0 : index
    %59 = vector.load %57[%58, %c0_37] : memref<128x128xf32, #tpu.memory_space<vmem>>, vector<128x128xf32>
    tpu.vector_store %57[%58, %c0_37], %55 {strides = array<i32>} : memref<128x128xf32, #tpu.memory_space<vmem>>, vector<128x128xf32>,
    %c2_i32_38 = arith.constant 2 : i32
    %60 = arith.cmpi eq, %arg0, %c2_i32_38 : i32
    %c0_i32_39 = arith.constant 0 : i32
    %61 = arith.cmpi eq, %arg1, %c0_i32_39 : i32
    %62 = arith.andi %60, %61 : i1
    %63 = arith.extui %62 : i1 to i32
    %c0_i32_40 = arith.constant 0 : i32
    %64 = arith.cmpi ne, %63, %c0_i32_40 : i32
    scf.if %64 {
      %c0_41 = arith.constant 0 : index
      %c0_42 = arith.constant 0 : index
      %65 = vector.load %arg8[%c0_41, %c0_42] : memref<8x128xf32, #tpu.memory_space<vmem>>, vector<8x128xf32>
      %66 = arith.index_cast %20 : i32 to index
      %c0_43 = arith.constant 0 : index
      %c0_44 = arith.constant 0 : index
      %67 = vector.load %arg12[%66, %c0_43, %c0_44] : memref<2x128x128xf32, #tpu.memory_space<vmem>>, vector<1x128x128xf32>
      %68 = vector.shape_cast %67 : vector<1x128x128xf32> to vector<128x128xf32>
      %cst_45 = arith.constant dense<0.000000e+00> : vector<8x128xf32>
      %69 = tpu.matmul %65, %68, %cst_45 {dimension_numbers = #tpu.dot_dimension_numbers<[1], [0], [0], [1], [0, 0, 1, 1], [], []>} : vector<8x128xf32>, vector<128x128xf32>, vector<8x128xf32> -> vector<8x128xf32>
      %c0_46 = arith.constant 0 : index
      %c0_47 = arith.constant 0 : index
      %70 = vector.load %arg9[%c0_46, %c0_47] : memref<128x128xf32, #tpu.memory_space<vmem>>, vector<128x128xf32>
      %cst_48 = arith.constant dense<0.000000e+00> : vector<8x128xf32>
      %71 = tpu.matmul %69, %70, %cst_48 {dimension_numbers = #tpu.dot_dimension_numbers<[1], [0], [0], [1], [0, 0, 1, 1], [], []>} : vector<8x128xf32>, vector<128x128xf32>, vector<8x128xf32> -> vector<8x128xf32>
      %c0_49 = arith.constant 0 : index
      %c0_50 = arith.constant 0 : index
      %72 = vector.load %arg10[%c0_49, %c0_50] : memref<1x128xf32, #tpu.memory_space<vmem>>, vector<1x128xf32>
      %73 = vector.broadcast %72 : vector<1x128xf32> to vector<8x128xf32>
      %74 = arith.addf %71, %73 : vector<8x128xf32>
      %c0_51 = arith.constant 0 : index
      %c0_52 = arith.constant 0 : index
      %75 = vector.load %arg11[%c0_51, %c0_52] : memref<8x128xf32, #tpu.memory_space<vmem>>, vector<8x128xf32>
      tpu.vector_store %arg11[%c0_51, %c0_52], %74 {strides = array<i32>} : memref<8x128xf32, #tpu.memory_space<vmem>>, vector<8x128xf32>,
    } else {
    }
    return
  }
  func.func @transform_0(%arg0: i32, %arg1: i32) -> (i32, i32) {
    %c0_i32 = arith.constant 0 : i32
    %c0_i32_0 = arith.constant 0 : i32
    return %arg1, %c0_i32 : i32, i32
  }
  func.func @transform_1(%arg0: i32, %arg1: i32) -> (i32, i32) {
    %c0_i32 = arith.constant 0 : i32
    %c0_i32_0 = arith.constant 0 : i32
    %c0_i32_1 = arith.constant 0 : i32
    return %c0_i32, %c0_i32_0 : i32, i32
  }
  func.func @transform_2(%arg0: i32, %arg1: i32) -> (i32, i32, i32) {
    %c0_i32 = arith.constant 0 : i32
    %c0_i32_0 = arith.constant 0 : i32
    %c0_i32_1 = arith.constant 0 : i32
    return %arg0, %c0_i32, %c0_i32_0 : i32, i32, i32
  }
  func.func @transform_3(%arg0: i32, %arg1: i32) -> (i32, i32, i32) {
    %c0_i32 = arith.constant 0 : i32
    %c0_i32_0 = arith.constant 0 : i32
    %c0_i32_1 = arith.constant 0 : i32
    return %arg0, %c0_i32, %c0_i32_0 : i32, i32, i32
  }
  func.func @transform_4(%arg0: i32, %arg1: i32) -> (i32, i32, i32) {
    %c0_i32 = arith.constant 0 : i32
    %c0_i32_0 = arith.constant 0 : i32
    %c0_i32_1 = arith.constant 0 : i32
    return %arg0, %c0_i32, %c0_i32_0 : i32, i32, i32
  }
  func.func @transform_5(%arg0: i32, %arg1: i32) -> (i32, i32, i32) {
    %c0_i32 = arith.constant 0 : i32
    %c0_i32_0 = arith.constant 0 : i32
    %c0_i32_1 = arith.constant 0 : i32
    return %arg0, %c0_i32, %c0_i32_0 : i32, i32, i32
  }
  func.func @transform_6(%arg0: i32, %arg1: i32) -> (i32, i32) {
    %c0_i32 = arith.constant 0 : i32
    %c0_i32_0 = arith.constant 0 : i32
    %c0_i32_1 = arith.constant 0 : i32
    return %c0_i32, %c0_i32_0 : i32, i32
  }
  func.func @transform_7(%arg0: i32, %arg1: i32) -> (i32, i32) {
    %c0_i32 = arith.constant 0 : i32
    %c0_i32_0 = arith.constant 0 : i32
    %c0_i32_1 = arith.constant 0 : i32
    return %c0_i32, %c0_i32_0 : i32, i32
  }
  func.func @transform_8(%arg0: i32, %arg1: i32) -> (i32, i32) {
    %c0_i32 = arith.constant 0 : i32
    %c0_i32_0 = arith.constant 0 : i32
    %c0_i32_1 = arith.constant 0 : i32
    return %c0_i32, %c0_i32_0 : i32, i32
  }
  func.func @transform_9(%arg0: i32, %arg1: i32) -> (i32, i32) {
    %c0_i32 = arith.constant 0 : i32
    %c0_i32_0 = arith.constant 0 : i32
    %c0_i32_1 = arith.constant 0 : i32
    return %c0_i32, %c0_i32_0 : i32, i32
  }
}

</mosaic_0001>

<llo_original>
// kernel: gin_forward.1
$region0: #{gin_forward.1}
  #allocation0 [shape = 'u32[]', space=smem, size = 0x4, offset = 0x4, fixed_abs, tag = 'smem constant byte address 0x4 - core index']
  #allocation1 [shape = 'u32[144,128]{1,0:T(1,128)}', space=vmem, size = 0x12000, scoped, tag = 'internal scratch']
  #allocation2 [shape = 'f32[2,128,128]{2,1,0:T(8,128)}', space=vmem, size = 0x20000, scoped, tag = 'scratch operand']
  %s0 = inlined_call_operand.vmem [shape: bf16[128,128], index: 0, kind: input, shape index: {}]
  %s1 = inlined_call_operand.vmem [shape: f32[128,128], index: 1, kind: input, shape index: {}]
  %s2 = inlined_call_operand.vmem [shape: f32[3,128,128], index: 2, kind: input, shape index: {}]
  %s3 = inlined_call_operand.vmem [shape: f32[3,1,128], index: 3, kind: input, shape index: {}]
  %s4 = inlined_call_operand.vmem [shape: f32[3,128,128], index: 4, kind: input, shape index: {}]
  %s5 = inlined_call_operand.vmem [shape: f32[3,1,128], index: 5, kind: input, shape index: {}]
  %s6 = inlined_call_operand.vmem [shape: f32[8,128], index: 6, kind: input, shape index: {}]
  %s7 = inlined_call_operand.vmem [shape: f32[128,128], index: 7, kind: input, shape index: {}]
  %s8 = inlined_call_operand.vmem [shape: f32[1,128], index: 8, kind: input, shape index: {}]
  %s9 = inlined_call_operand.vmem [shape: f32[8,128], index: 9, kind: output, shape index: {}]
  %s10 = sld [smem:[#allocation0]]
  $region77: #{gin_forward.1} parent=0
    _
  %s12 = ssub.s32 1, %s10
  %s13 = scalar_select 0, %s12, %s10
  loop: start=0, step=1, limit=5
  $region2: #{gin_forward.1} parent=0 // loop_pre_header
    _
  $region3: #{gin_forward.1} parent=0 // loop_header
    %s15 = sphi 0, %s19
    %p16 = scmp.ge.s32.totalorder %s15, 5
    %s22 = sphi 0, %s34
    %s23 = sphi 0, %s30
    %s24 = sphi 0, %s22
    %s25 = sphi 0, %s23
    %s26 = sphi 0, %s24
    %s27 = sphi 0, %s25
    %s37 = sphi 0, %s39
    %s40 = sphi 0, %s37
    %s41 = sphi 0, %s40
    %s57 = sphi 0, %s41
    %s61 = sphi 0, %s61
    %s63 = sphi 0, %s61
    %s64 = sphi 0, %s63
    %s78 = sphi 0, %s64
    %s84 = sphi 0, %s86
    %s87 = sphi 0, %s84
    %s88 = sphi 0, %s87
    %s104 = sphi 0, %s88
    %s110 = sphi 0, %s112
    %s113 = sphi 0, %s110
    %s114 = sphi 0, %s113
    %s130 = sphi 0, %s114
    %s136 = sphi 0, %s138
    %s139 = sphi 0, %s136
    %s140 = sphi 0, %s139
    %s156 = sphi 0, %s140
    %s162 = sphi 0, %s164
    %s165 = sphi 0, %s162
    %s166 = sphi 0, %s165
    %s182 = sphi 0, %s166
    %s186 = sphi 0, %s186
    %s188 = sphi 0, %s186
    %s189 = sphi 0, %s188
    %s203 = sphi 0, %s189
    %s207 = sphi 0, %s207
    %s209 = sphi 0, %s207
    %s210 = sphi 0, %s209
    %s224 = sphi 0, %s210
    %s228 = sphi 0, %s228
    %s230 = sphi 0, %s228
    %s231 = sphi 0, %s230
    %s245 = sphi 0, %s231
    %s249 = sphi 0, %s249
    %s251 = sphi 0, %s249
    %s252 = sphi 0, %s251
    %s266 = sphi 0, %s252
  $region4: #{gin_forward.1} parent=0 // loop_header_branch
    %18 = sbr.rel (%p16) target = $region8
  $region5: #{gin_forward.1} parent=0 // loop_body
    %s20 = ssub.s32 %s15, 1
    %s21 = ssub.s32 %s15, 2
    %s28 = sadd.s32 1, %s23
    %p29 = scmp.ge.s32.totalorder %s28, 1
    %s30 = scalar_select %p29, 0, %s28
    %s31 = sadd.s32 1, %s22
    %s32 = scalar_select %p29, %s31, %s22
    %p33 = scmp.ge.s32.totalorder %s32, 3
    %s34 = scalar_select %p33, 0, %s32
    %s35 = ssub.s32 %s23, %s30
    %p36 = scmp.eq.s32.totalorder %s35, 0
    %s38 = sadd.s32 %s37, 1
    %s39 = scalar_select %p36, %s37, %s38
    %p42 = pneg %p36
    %p43 = scmp.eq.s32.totalorder %s15, 2
    %p44 = por %p42, %p43
    %p45 = scmp.ne.s32.totalorder %s37, %s40
    %p46 = scmp.eq.s32.totalorder %s15, 0
    %p47 = por %p45, %p46
    %p48 = scmp.ne.s32.totalorder %s37, %s40
    %p49 = scmp.eq.s32.totalorder %s20, 2
    %p50 = por %p48, %p49
    %p51 = scmp.ne.s32.totalorder %s40, %s41
    %p52 = scmp.eq.s32.totalorder %s20, 0
    %p53 = por %p51, %p52
    %p54 = scmp.ne.s32.totalorder %s40, %s41
    %p55 = scmp.eq.s32.totalorder %s21, 2
    %p56 = por %p54, %p55
    %p58 = scmp.ne.s32.totalorder %s41, %s57
    %p59 = scmp.eq.s32.totalorder %s21, 0
    %p60 = por %p58, %p59
    %s62 = sadd.s32 %s61, 1
    %p65 = scmp.eq.s32.totalorder %s15, 2
    %p66 = scmp.ne.s32.totalorder %s61, %s63
    %p67 = scmp.eq.s32.totalorder %s15, 0
    %p68 = por %p66, %p67
    %p69 = scmp.ne.s32.totalorder %s61, %s63
    %p70 = scmp.eq.s32.totalorder %s20, 2
    %p71 = por %p69, %p70
    %p72 = scmp.ne.s32.totalorder %s63, %s64
    %p73 = scmp.eq.s32.totalorder %s20, 0
    %p74 = por %p72, %p73
    %p75 = scmp.ne.s32.totalorder %s63, %s64
    %p76 = scmp.eq.s32.totalorder %s21, 2
    %p77 = por %p75, %p76
    %p79 = scmp.ne.s32.totalorder %s64, %s78
    %p80 = scmp.eq.s32.totalorder %s21, 0
    %p81 = por %p79, %p80
    %s82 = ssub.s32 %s22, %s34
    %p83 = scmp.eq.s32.totalorder %s82, 0
    %s85 = sadd.s32 %s84, 1
    %s86 = scalar_select %p83, %s84, %s85
    %p89 = pneg %p83
    %p90 = scmp.eq.s32.totalorder %s15, 2
    %p91 = por %p89, %p90
    %p92 = scmp.ne.s32.totalorder %s84, %s87
    %p93 = scmp.eq.s32.totalorder %s15, 0
    %p94 = por %p92, %p93
    %p95 = scmp.ne.s32.totalorder %s84, %s87
    %p96 = scmp.eq.s32.totalorder %s20, 2
    %p97 = por %p95, %p96
    %p98 = scmp.ne.s32.totalorder %s87, %s88
    %p99 = scmp.eq.s32.totalorder %s20, 0
    %p100 = por %p98, %p99
    %p101 = scmp.ne.s32.totalorder %s87, %s88
    %p102 = scmp.eq.s32.totalorder %s21, 2
    %p103 = por %p101, %p102
    %p105 = scmp.ne.s32.totalorder %s88, %s104
    %p106 = scmp.eq.s32.totalorder %s21, 0
    %p107 = por %p105, %p106
    %s108 = ssub.s32 %s22, %s34
    %p109 = scmp.eq.s32.totalorder %s108, 0
    %s111 = sadd.s32 %s110, 1
    %s112 = scalar_select %p109, %s110, %s111
    %p115 = pneg %p109
    %p116 = scmp.eq.s32.totalorder %s15, 2
    %p117 = por %p115, %p116
    %p118 = scmp.ne.s32.totalorder %s110, %s113
    %p119 = scmp.eq.s32.totalorder %s15, 0
    %p120 = por %p118, %p119
    %p121 = scmp.ne.s32.totalorder %s110, %s113
    %p122 = scmp.eq.s32.totalorder %s20, 2
    %p123 = por %p121, %p122
    %p124 = scmp.ne.s32.totalorder %s113, %s114
    %p125 = scmp.eq.s32.totalorder %s20, 0
    %p126 = por %p124, %p125
    %p127 = scmp.ne.s32.totalorder %s113, %s114
    %p128 = scmp.eq.s32.totalorder %s21, 2
    %p129 = por %p127, %p128
    %p131 = scmp.ne.s32.totalorder %s114, %s130
    %p132 = scmp.eq.s32.totalorder %s21, 0
    %p133 = por %p131, %p132
    %s134 = ssub.s32 %s22, %s34
    %p135 = scmp.eq.s32.totalorder %s134, 0
    %s137 = sadd.s32 %s136, 1
    %s138 = scalar_select %p135, %s136, %s137
    %p141 = pneg %p135
    %p142 = scmp.eq.s32.totalorder %s15, 2
    %p143 = por %p141, %p142
    %p144 = scmp.ne.s32.totalorder %s136, %s139
    %p145 = scmp.eq.s32.totalorder %s15, 0
    %p146 = por %p144, %p145
    %p147 = scmp.ne.s32.totalorder %s136, %s139
    %p148 = scmp.eq.s32.totalorder %s20, 2
    %p149 = por %p147, %p148
    %p150 = scmp.ne.s32.totalorder %s139, %s140
    %p151 = scmp.eq.s32.totalorder %s20, 0
    %p152 = por %p150, %p151
    %p153 = scmp.ne.s32.totalorder %s139, %s140
    %p154 = scmp.eq.s32.totalorder %s21, 2
    %p155 = por %p153, %p154
    %p157 = scmp.ne.s32.totalorder %s140, %s156
    %p158 = scmp.eq.s32.totalorder %s21, 0
    %p159 = por %p157, %p158
    %s160 = ssub.s32 %s22, %s34
    %p161 = scmp.eq.s32.totalorder %s160, 0
    %s163 = sadd.s32 %s162, 1
    %s164 = scalar_select %p161, %s162, %s163
    %p167 = pneg %p161
    %p168 = scmp.eq.s32.totalorder %s15, 2
    %p169 = por %p167, %p168
    %p170 = scmp.ne.s32.totalorder %s162, %s165
    %p171 = scmp.eq.s32.totalorder %s15, 0
    %p172 = por %p170, %p171
    %p173 = scmp.ne.s32.totalorder %s162, %s165
    %p174 = scmp.eq.s32.totalorder %s20, 2
    %p175 = por %p173, %p174
    %p176 = scmp.ne.s32.totalorder %s165, %s166
    %p177 = scmp.eq.s32.totalorder %s20, 0
    %p178 = por %p176, %p177
    %p179 = scmp.ne.s32.totalorder %s165, %s166
    %p180 = scmp.eq.s32.totalorder %s21, 2
    %p181 = por %p179, %p180
    %p183 = scmp.ne.s32.totalorder %s166, %s182
    %p184 = scmp.eq.s32.totalorder %s21, 0
    %p185 = por %p183, %p184
    %s187 = sadd.s32 %s186, 1
    %p190 = scmp.eq.s32.totalorder %s15, 2
    %p191 = scmp.ne.s32.totalorder %s186, %s188
    %p192 = scmp.eq.s32.totalorder %s15, 0
    %p193 = por %p191, %p192
    %p194 = scmp.ne.s32.totalorder %s186, %s188
    %p195 = scmp.eq.s32.totalorder %s20, 2
    %p196 = por %p194, %p195
    %p197 = scmp.ne.s32.totalorder %s188, %s189
    %p198 = scmp.eq.s32.totalorder %s20, 0
    %p199 = por %p197, %p198
    %p200 = scmp.ne.s32.totalorder %s188, %s189
    %p201 = scmp.eq.s32.totalorder %s21, 2
    %p202 = por %p200, %p201
    %p204 = scmp.ne.s32.totalorder %s189, %s203
    %p205 = scmp.eq.s32.totalorder %s21, 0
    %p206 = por %p204, %p205
    %s208 = sadd.s32 %s207, 1
    %p211 = scmp.eq.s32.totalorder %s15, 2
    %p212 = scmp.ne.s32.totalorder %s207, %s209
    %p213 = scmp.eq.s32.totalorder %s15, 0
    %p214 = por %p212, %p213
    %p215 = scmp.ne.s32.totalorder %s207, %s209
    %p216 = scmp.eq.s32.totalorder %s20, 2
    %p217 = por %p215, %p216
    %p218 = scmp.ne.s32.totalorder %s209, %s210
    %p219 = scmp.eq.s32.totalorder %s20, 0
    %p220 = por %p218, %p219
    %p221 = scmp.ne.s32.totalorder %s209, %s210
    %p222 = scmp.eq.s32.totalorder %s21, 2
    %p223 = por %p221, %p222
    %p225 = scmp.ne.s32.totalorder %s210, %s224
    %p226 = scmp.eq.s32.totalorder %s21, 0
    %p227 = por %p225, %p226
    %s229 = sadd.s32 %s228, 1
    %p232 = scmp.eq.s32.totalorder %s15, 2
    %p233 = scmp.ne.s32.totalorder %s228, %s230
    %p234 = scmp.eq.s32.totalorder %s15, 0
    %p235 = por %p233, %p234
    %p236 = scmp.ne.s32.totalorder %s228, %s230
    %p237 = scmp.eq.s32.totalorder %s20, 2
    %p238 = por %p236, %p237
    %p239 = scmp.ne.s32.totalorder %s230, %s231
    %p240 = scmp.eq.s32.totalorder %s20, 0
    %p241 = por %p239, %p240
    %p242 = scmp.ne.s32.totalorder %s230, %s231
    %p243 = scmp.eq.s32.totalorder %s21, 2
    %p244 = por %p242, %p243
    %p246 = scmp.ne.s32.totalorder %s231, %s245
    %p247 = scmp.eq.s32.totalorder %s21, 0
    %p248 = por %p246, %p247
    %s250 = sadd.s32 %s249, 1
    %p253 = scmp.eq.s32.totalorder %s15, 2
    %p254 = scmp.ne.s32.totalorder %s249, %s251
    %p255 = scmp.eq.s32.totalorder %s15, 0
    %p256 = por %p254, %p255
    %p257 = scmp.ne.s32.totalorder %s249, %s251
    %p258 = scmp.eq.s32.totalorder %s20, 2
    %p259 = por %p257, %p258
    %p260 = scmp.ne.s32.totalorder %s251, %s252
    %p261 = scmp.eq.s32.totalorder %s20, 0
    %p262 = por %p260, %p261
    %p263 = scmp.ne.s32.totalorder %s251, %s252
    %p264 = scmp.eq.s32.totalorder %s21, 2
    %p265 = por %p263, %p264
    %p267 = scmp.ne.s32.totalorder %s252, %s266
    %p268 = scmp.eq.s32.totalorder %s21, 0
    %p269 = por %p267, %p268
    %p270 = scmp.le.s32.totalorder 1, %s15
    %p271 = scmp.lt.s32.totalorder %s15, 4
    %p272 = pnand %p270, %p271
    %p273 = pneg %p272
    // Predicated region
    $region9: #{gin_forward.1} parent=5 // pred_check
      _
    $region10: #{gin_forward.1} parent=5 // pred_check_branch
      %275 = sbr.rel (%p272) target = $region12
    $region11: #{gin_forward.1} parent=5 // pred_region
      %s276 = ssub.s32 %s15, 1
      // Predicated region
      $region13: #{gin_forward.1} parent=11 // pred_check
        %p277 = pneg %p53
      $region14: #{gin_forward.1} parent=11 // pred_check_branch
        %279 = sbr.rel (%p277) target = $region16
      $region15: #{gin_forward.1} parent=11 // pred_region
        %s280 = smul.u32 16, %s25
        %p281 = scmp.lt.s32.totalorder %s280, 15
        %s282 = scalar_select %p281, %s280, 15
        %s283 = smul.addr %s282, 4
        %s284 = scalar_lea.vmem %s0, %s283
        %s285 = smul.u32 16, %s25
      $region16: #{gin_forward.1} parent=11 // pred_fallthru
        _
      // Predicated region
      $region17: #{gin_forward.1} parent=11 // pred_check
        %p286 = pneg %p74
      $region18: #{gin_forward.1} parent=11 // pred_check_branch
        %288 = sbr.rel (%p286) target = $region20
      $region19: #{gin_forward.1} parent=11 // pred_region
        _
      $region20: #{gin_forward.1} parent=11 // pred_fallthru
        _
      // Predicated region
      $region21: #{gin_forward.1} parent=11 // pred_check
        %p289 = pneg %p199
      $region22: #{gin_forward.1} parent=11 // pred_check_branch
        %291 = sbr.rel (%p289) target = $region24
      $region23: #{gin_forward.1} parent=11 // pred_region
        _
      $region24: #{gin_forward.1} parent=11 // pred_fallthru
        _
      // Predicated region
      $region25: #{gin_forward.1} parent=11 // pred_check
        %p292 = pneg %p220
      $region26: #{gin_forward.1} parent=11 // pred_check_branch
        %294 = sbr.rel (%p292) target = $region28
      $region27: #{gin_forward.1} parent=11 // pred_region
        _
      $region28: #{gin_forward.1} parent=11 // pred_fallthru
        _
      // Predicated region
      $region29: #{gin_forward.1} parent=11 // pred_check
        %p295 = pneg %p241
      $region30: #{gin_forward.1} parent=11 // pred_check_branch
        %297 = sbr.rel (%p295) target = $region32
      $region31: #{gin_forward.1} parent=11 // pred_region
        _
      $region32: #{gin_forward.1} parent=11 // pred_fallthru
        _
    $region12: #{gin_forward.1} parent=5 // pred_fallthru
      _
    %p298 = scmp.lt.s32.totalorder %s15, 3
    // Predicated region
    $region33: #{gin_forward.1} parent=5 // pred_check
      %p299 = pneg %p298
    $region34: #{gin_forward.1} parent=5 // pred_check_branch
      %301 = sbr.rel (%p299) target = $region36
    $region35: #{gin_forward.1} parent=5 // pred_region
      // Predicated region
      $region37: #{gin_forward.1} parent=35 // pred_check
        %p302 = pneg %p94
      $region38: #{gin_forward.1} parent=35 // pred_check_branch
        %304 = sbr.rel (%p302) target = $region40
      $region39: #{gin_forward.1} parent=35 // pred_region
        %p305 = scmp.lt.s32.totalorder %s22, 2
        %s306 = scalar_select %p305, %s22, 2
        %s307 = smul.addr %s306, 16
        %s308 = smul.addr %s307, 8
        %s309 = scalar_lea.vmem %s2, %s308
      $region40: #{gin_forward.1} parent=35 // pred_fallthru
        _
      // Predicated region
      $region41: #{gin_forward.1} parent=35 // pred_check
        %p310 = pneg %p120
      $region42: #{gin_forward.1} parent=35 // pred_check_branch
        %312 = sbr.rel (%p310) target = $region44
      $region43: #{gin_forward.1} parent=35 // pred_region
        %p313 = scmp.lt.s32.totalorder %s22, 2
        %s314 = scalar_select %p313, %s22, 2
        %s315 = scalar_lea.vmem %s3, %s314
      $region44: #{gin_forward.1} parent=35 // pred_fallthru
        _
      // Predicated region
      $region45: #{gin_forward.1} parent=35 // pred_check
        %p316 = pneg %p146
      $region46: #{gin_forward.1} parent=35 // pred_check_branch
        %318 = sbr.rel (%p316) target = $region48
      $region47: #{gin_forward.1} parent=35 // pred_region
        %p319 = scmp.lt.s32.totalorder %s22, 2
        %s320 = scalar_select %p319, %s22, 2
        %s321 = smul.addr %s320, 16
        %s322 = smul.addr %s321, 8
        %s323 = scalar_lea.vmem %s4, %s322
      $region48: #{gin_forward.1} parent=35 // pred_fallthru
        _
      // Predicated region
      $region49: #{gin_forward.1} parent=35 // pred_check
        %p324 = pneg %p172
      $region50: #{gin_forward.1} parent=35 // pred_check_branch
        %326 = sbr.rel (%p324) target = $region52
      $region51: #{gin_forward.1} parent=35 // pred_region
        %p327 = scmp.lt.s32.totalorder %s22, 2
        %s328 = scalar_select %p327, %s22, 2
        %s329 = scalar_lea.vmem %s5, %s328
      $region52: #{gin_forward.1} parent=35 // pred_fallthru
        _
    $region36: #{gin_forward.1} parent=5 // pred_fallthru
      _
    %p330 = scmp.le.s32.totalorder 1, %s15
    %p331 = scmp.lt.s32.totalorder %s15, 4
    %p332 = pnand %p330, %p331
    %p333 = pneg %p332
    // Predicated region
    $region53: #{gin_forward.1} parent=5 // pred_check
      _
    $region54: #{gin_forward.1} parent=5 // pred_check_branch
      %335 = sbr.rel (%p332) target = $region56
    $region55: #{gin_forward.1} parent=5 // pred_region
      %s336 = ssub.s32 %s15, 1
      %s337 = smul.u32 16, %s25
      %p338 = scmp.lt.s32.totalorder %s337, 15
      %s339 = scalar_select %p338, %s337, 15
      %s340 = smul.addr %s339, 4
      %s341 = scalar_lea.vmem %s0, %s340
      %p342 = pneg %p53
      %p343 = pneg %p50
      %p344 = pneg %p74
      %p345 = pneg %p71
      %p346 = scmp.lt.s32.totalorder %s24, 2
      %s347 = scalar_select %p346, %s24, 2
      %s348 = smul.addr %s347, 16
      %s349 = smul.addr %s348, 8
      %s350 = scalar_lea.vmem %s2, %s349
      %p351 = pneg %p100
      %p352 = pneg %p97
      %p353 = scmp.lt.s32.totalorder %s24, 2
      %s354 = scalar_select %p353, %s24, 2
      %s355 = scalar_lea.vmem %s3, %s354
      %p356 = pneg %p126
      %p357 = pneg %p123
      %p358 = scmp.lt.s32.totalorder %s24, 2
      %s359 = scalar_select %p358, %s24, 2
      %s360 = smul.addr %s359, 16
      %s361 = smul.addr %s360, 8
      %s362 = scalar_lea.vmem %s4, %s361
      %p363 = pneg %p152
      %p364 = pneg %p149
      %p365 = scmp.lt.s32.totalorder %s24, 2
      %s366 = scalar_select %p365, %s24, 2
      %s367 = scalar_lea.vmem %s5, %s366
      %p368 = pneg %p178
      %p369 = pneg %p175
      %p370 = pneg %p199
      %p371 = pneg %p196
      %p372 = pneg %p220
      %p373 = pneg %p217
      %p374 = pneg %p241
      %p375 = pneg %p238
      %p376 = pneg %p262
      %p377 = pneg %p259
      %s378 = smul.u32 16, %s25
      %p379 = scmp.lt.s32.totalorder %s378, 15
      %s380 = scalar_select %p379, %s378, 15
      %s381 = smul.addr %s380, 4
      %s382 = scalar_lea.vmem %s0, %s381
      %s383 = smul.u32 16, %s25
      %p384 = scmp.lt.s32.totalorder %s24, 2
      %s385 = scalar_select %p384, %s24, 2
      %s386 = smul.addr %s385, 16
      %s387 = smul.addr %s386, 8
      %s388 = scalar_lea.vmem %s2, %s387
      %p389 = scmp.lt.s32.totalorder %s24, 2
      %s390 = scalar_select %p389, %s24, 2
      %s391 = scalar_lea.vmem %s3, %s390
      %p392 = scmp.lt.s32.totalorder %s24, 2
      %s393 = scalar_select %p392, %s24, 2
      %s394 = smul.addr %s393, 16
      %s395 = smul.addr %s394, 8
      %s396 = scalar_lea.vmem %s4, %s395
      %p397 = scmp.lt.s32.totalorder %s24, 2
      %s398 = scalar_select %p397, %s24, 2
      %s399 = scalar_lea.vmem %s5, %s398
      %p401 = scmp.lt.s32.totalorder %s24, 0
      %s402 = ssub.s32 0, %s24
      %s403 = scalar_select %p401, %s402, %s24
      %s404 = sand.u32 %s403, 1
      %s405 = ssub.s32 0, %s404
      %s406 = scalar_select %p401, %s405, %s404
      %p407 = scmp.ne.s32.totalorder %s406, 0
      %p408 = scmp.lt.s32.totalorder %s406, 0
      %p409 = pnand %p408, %p407
      %p410 = pneg %p409
      %s411 = sadd.s32 %s406, 2
      %s412 = scalar_select %p410, %s411, %s406
      %s413 = sadd.s32 %s24, 1
      %p414 = scmp.lt.s32.totalorder %s413, 0
      %s415 = ssub.s32 0, %s413
      %s416 = scalar_select %p414, %s415, %s413
      %s417 = sand.u32 %s416, 1
      %s418 = ssub.s32 0, %s417
      %s419 = scalar_select %p414, %s418, %s417
      %p420 = scmp.ne.s32.totalorder %s419, 0
      %p421 = scmp.lt.s32.totalorder %s419, 0
      %p422 = pnand %p421, %p420
      %p423 = pneg %p422
      %s424 = sadd.s32 %s419, 2
      %s425 = scalar_select %p423, %s424, %s419
      %p426 = scmp.eq.s32.totalorder %s24, 0
      %p427 = scmp.eq.s32.totalorder %s25, 0
      %p428 = pnand %p426, %p427
      %p429 = pneg %p428
      // Predicated region
      $region57: #{gin_forward.1} parent=55 // pred_check
        _
      $region58: #{gin_forward.1} parent=55 // pred_check_branch
        %431 = sbr.rel (%p428) target = $region60
      $region59: #{gin_forward.1} parent=55 // pred_region
        %v432 = vld [vmem:[%s1] sm:$0xff]
        %v433 = vld [vmem:[%s1 + $0x8] sm:$0xff]
        %v434 = vld [vmem:[%s1 + $0x10] sm:$0xff]
        %v435 = vld [vmem:[%s1 + $0x18] sm:$0xff]
        %v436 = vld [vmem:[%s1 + $0x20] sm:$0xff]
        %v437 = vld [vmem:[%s1 + $0x28] sm:$0xff]
        %v438 = vld [vmem:[%s1 + $0x30] sm:$0xff]
        %v439 = vld [vmem:[%s1 + $0x38] sm:$0xff]
        %v440 = vld [vmem:[%s1 + $0x40] sm:$0xff]
        %v441 = vld [vmem:[%s1 + $0x48] sm:$0xff]
        %v442 = vld [vmem:[%s1 + $0x50] sm:$0xff]
        %v443 = vld [vmem:[%s1 + $0x58] sm:$0xff]
        %v444 = vld [vmem:[%s1 + $0x60] sm:$0xff]
        %v445 = vld [vmem:[%s1 + $0x68] sm:$0xff]
        %v446 = vld [vmem:[%s1 + $0x70] sm:$0xff]
        %v447 = vld [vmem:[%s1 + $0x78] sm:$0xff]
        %448 = vst [vmem:[#allocation2] sm:$0xff] %v432
        %449 = vst [vmem:[#allocation2 + $0x8] sm:$0xff] %v433
        %450 = vst [vmem:[#allocation2 + $0x10] sm:$0xff] %v434
        %451 = vst [vmem:[#allocation2 + $0x18] sm:$0xff] %v435
        %452 = vst [vmem:[#allocation2 + $0x20] sm:$0xff] %v436
        %453 = vst [vmem:[#allocation2 + $0x28] sm:$0xff] %v437
        %454 = vst [vmem:[#allocation2 + $0x30] sm:$0xff] %v438
        %455 = vst [vmem:[#allocation2 + $0x38] sm:$0xff] %v439
        %456 = vst [vmem:[#allocation2 + $0x40] sm:$0xff] %v440
        %457 = vst [vmem:[#allocation2 + $0x48] sm:$0xff] %v441
        %458 = vst [vmem:[#allocation2 + $0x50] sm:$0xff] %v442
        %459 = vst [vmem:[#allocation2 + $0x58] sm:$0xff] %v443
        %460 = vst [vmem:[#allocation2 + $0x60] sm:$0xff] %v444
        %461 = vst [vmem:[#allocation2 + $0x68] sm:$0xff] %v445
        %462 = vst [vmem:[#allocation2 + $0x70] sm:$0xff] %v446
        %463 = vst [vmem:[#allocation2 + $0x78] sm:$0xff] %v447
      $region60: #{gin_forward.1} parent=55 // pred_fallthru
        _
      %v464 = vld [vmem:[%s382] sm:$0xf]
      %v465 = vld [vmem:[%s382 + $0x4] sm:$0xf]
      %v466 = vld [vmem:[%s382 + $0x8] sm:$0xf]
      %v467 = vld [vmem:[%s382 + $0xc] sm:$0xf]
      %v468 = vld [vmem:[%s382 + $0x10] sm:$0xf]
      %v469 = vld [vmem:[%s382 + $0x14] sm:$0xf]
      %v470 = vld [vmem:[%s382 + $0x18] sm:$0xf]
      %v471 = vld [vmem:[%s382 + $0x1c] sm:$0xf]
      %v472 = vld [vmem:[%s382 + $0x20] sm:$0xf]
      %v473 = vld [vmem:[%s382 + $0x24] sm:$0xf]
      %v474 = vld [vmem:[%s382 + $0x28] sm:$0xf]
      %v475 = vld [vmem:[%s382 + $0x2c] sm:$0xf]
      %v476 = vld [vmem:[%s382 + $0x30] sm:$0xf]
      %v477 = vld [vmem:[%s382 + $0x34] sm:$0xf]
      %v478 = vld [vmem:[%s382 + $0x38] sm:$0xf]
      %v479 = vld [vmem:[%s382 + $0x3c] sm:$0xf]
      %s480 = smul.u32 %s412, 128
      %s481 = scalar_lea.vmem [#allocation2], %s480
      %v482 = vld [vmem:[%s481] sm:$0xff]
      %v483 = vld [vmem:[%s481 + $0x8] sm:$0xff]
      %v484 = vld [vmem:[%s481 + $0x10] sm:$0xff]
      %v485 = vld [vmem:[%s481 + $0x18] sm:$0xff]
      %v486 = vld [vmem:[%s481 + $0x20] sm:$0xff]
      %v487 = vld [vmem:[%s481 + $0x28] sm:$0xff]
      %v488 = vld [vmem:[%s481 + $0x30] sm:$0xff]
      %v489 = vld [vmem:[%s481 + $0x38] sm:$0xff]
      %v490 = vld [vmem:[%s481 + $0x40] sm:$0xff]
      %v491 = vld [vmem:[%s481 + $0x48] sm:$0xff]
      %v492 = vld [vmem:[%s481 + $0x50] sm:$0xff]
      %v493 = vld [vmem:[%s481 + $0x58] sm:$0xff]
      %v494 = vld [vmem:[%s481 + $0x60] sm:$0xff]
      %v495 = vld [vmem:[%s481 + $0x68] sm:$0xff]
      %v496 = vld [vmem:[%s481 + $0x70] sm:$0xff]
      %v497 = vld [vmem:[%s481 + $0x78] sm:$0xff]
      %v514 = vunpack.c.l.b16 %v464
      %v515 = vunpack.c.l.b16 %v465
      %v516 = vunpack.c.l.b16 %v466
      %v517 = vunpack.c.l.b16 %v467
      %v518 = vunpack.c.l.b16 %v468
      %v519 = vunpack.c.l.b16 %v469
      %v520 = vunpack.c.l.b16 %v470
      %v521 = vunpack.c.l.b16 %v471
      %v522 = vunpack.c.l.b16 %v472
      %v523 = vunpack.c.l.b16 %v473
      %v524 = vunpack.c.l.b16 %v474
      %v525 = vunpack.c.l.b16 %v475
      %v526 = vunpack.c.l.b16 %v476
      %v527 = vunpack.c.l.b16 %v477
      %v528 = vunpack.c.l.b16 %v478
      %v529 = vunpack.c.l.b16 %v479
      %v530 = vpack.c.b16 %v515, %v514
      %v531 = vpack.c.b16 %v517, %v516
      %v532 = vpack.c.b16 %v519, %v518
      %v533 = vpack.c.b16 %v521, %v520
      %v534 = vpack.c.b16 %v523, %v522
      %v535 = vpack.c.b16 %v525, %v524
      %v536 = vpack.c.b16 %v527, %v526
      %v537 = vpack.c.b16 %v529, %v528
      %546 = vmatprep.subr.mxu0 0.0
      %547 = vmatpush1.msra.mxu0 %v482
      %548 = vmatprep.subr.mxu0 0.0
      %549 = vmatpush1.msra.mxu0 %v483
      %550 = vmatprep.subr.mxu0 0.0
      %551 = vmatpush1.msra.mxu0 %v484
      %552 = vmatprep.subr.mxu0 0.0
      %553 = vmatpush1.msra.mxu0 %v485
      %554 = vmatprep.subr.mxu0 0.0
      %555 = vmatpush1.msra.mxu0 %v486
      %556 = vmatprep.subr.mxu0 0.0
      %557 = vmatpush1.msra.mxu0 %v487
      %558 = vmatprep.subr.mxu0 0.0
      %559 = vmatpush1.msra.mxu0 %v488
      %560 = vmatprep.subr.mxu0 0.0
      %561 = vmatpush1.msra.mxu0 %v489
      %562 = vmatprep.subr.mxu0 0.0
      %563 = vmatpush1.msra.mxu0 %v490
      %564 = vmatprep.subr.mxu0 0.0
      %565 = vmatpush1.msra.mxu0 %v491
      %566 = vmatprep.subr.mxu0 0.0
      %567 = vmatpush1.msra.mxu0 %v492
      %568 = vmatprep.subr.mxu0 0.0
      %569 = vmatpush1.msra.mxu0 %v493
      %570 = vmatprep.subr.mxu0 0.0
      %571 = vmatpush1.msra.mxu0 %v494
      %572 = vmatprep.subr.mxu0 0.0
      %573 = vmatpush1.msra.mxu0 %v495
      %574 = vmatprep.subr.mxu0 0.0
      %575 = vmatpush1.msra.mxu0 %v496
      %576 = vmatprep.subr.mxu0 0.0
      %577 = vmatpush1.msra.mxu0 %v497
      %578 = vmatprep.subr.mxu0 0.0
      %579 = vmatpush1.msra.mxu0 0.0
      %580 = vmatprep.subr.mxu0 0.0
      %581 = vmatpush1.msra.mxu0 0.0
      %582 = vmatprep.subr.mxu0 0.0
      %583 = vmatpush1.msra.mxu0 0.0
      %584 = vmatprep.subr.mxu0 0.0
      %585 = vmatpush1.msra.mxu0 0.0
      %586 = vmatprep.subr.mxu0 0.0
      %587 = vmatpush1.msra.mxu0 0.0
      %588 = vmatprep.subr.mxu0 0.0
      %589 = vmatpush1.msra.mxu0 0.0
      %590 = vmatprep.subr.mxu0 0.0
      %591 = vmatpush1.msra.mxu0 0.0
      %592 = vmatprep.subr.mxu0 0.0
      %593 = vmatpush1.msra.mxu0 0.0
      %594 = vmatprep.subr.mxu0 0.0
      %595 = vmatpush1.msra.mxu0 0.0
      %596 = vmatprep.subr.mxu0 0.0
      %597 = vmatpush1.msra.mxu0 0.0
      %598 = vmatprep.subr.mxu0 0.0
      %599 = vmatpush1.msra.mxu0 0.0
      %600 = vmatprep.subr.mxu0 0.0
      %601 = vmatpush1.msra.mxu0 0.0
      %602 = vmatprep.subr.mxu0 0.0
      %603 = vmatpush1.msra.mxu0 0.0
      %604 = vmatprep.subr.mxu0 0.0
      %605 = vmatpush1.msra.mxu0 0.0
      %606 = vmatprep.subr.mxu0 0.0
      %607 = vmatpush1.msra.mxu0 0.0
      %608 = vmatprep.subr.mxu0 0.0
      %609 = vmatpush1.msra.mxu0 0.0
      %610 = vmatprep.mubr.bf16.mxu0 0
      %611 = vmatmul.mubr.bf16.gmra.mrb[0].mxu0 %v530
      %v612 = vpop.f32.mrb[0].mxu0
      %v613 = vadd.f32 0.0, %v612
      %v614 = vpop.f32.mrb[0].mxu0
      %v615 = vpop.f32.mrb[0].mxu0
      %v616 = vadd.f32 0.0, %v615
      %v617 = vpop.f32.mrb[0].mxu0
      %618 = vmatprep.mubr.bf16.mxu0 0
      %619 = vmatmul.mubr.bf16.gmra.mrb[0].mxu0 %v531
      %v620 = vpop.f32.mrb[0].mxu0
      %v621 = vadd.f32 0.0, %v620
      %v622 = vpop.f32.mrb[0].mxu0
      %v623 = vpop.f32.mrb[0].mxu0
      %v624 = vadd.f32 0.0, %v623
      %v625 = vpop.f32.mrb[0].mxu0
      %626 = vmatprep.mubr.bf16.mxu0 0
      %627 = vmatmul.mubr.bf16.gmra.mrb[0].mxu0 %v532
      %v628 = vpop.f32.mrb[0].mxu0
      %v629 = vadd.f32 0.0, %v628
      %v630 = vpop.f32.mrb[0].mxu0
      %v631 = vpop.f32.mrb[0].mxu0
      %v632 = vadd.f32 0.0, %v631
      %v633 = vpop.f32.mrb[0].mxu0
      %634 = vmatprep.mubr.bf16.mxu0 0
      %635 = vmatmul.mubr.bf16.gmra.mrb[0].mxu0 %v533
      %v636 = vpop.f32.mrb[0].mxu0
      %v637 = vadd.f32 0.0, %v636
      %v638 = vpop.f32.mrb[0].mxu0
      %v639 = vpop.f32.mrb[0].mxu0
      %v640 = vadd.f32 0.0, %v639
      %v641 = vpop.f32.mrb[0].mxu0
      %642 = vmatprep.mubr.bf16.mxu0 0
      %643 = vmatmul.mubr.bf16.gmra.mrb[0].mxu0 %v534
      %v644 = vpop.f32.mrb[0].mxu0
      %v645 = vadd.f32 0.0, %v644
      %v646 = vpop.f32.mrb[0].mxu0
      %v647 = vpop.f32.mrb[0].mxu0
      %v648 = vadd.f32 0.0, %v647
      %v649 = vpop.f32.mrb[0].mxu0
      %650 = vmatprep.mubr.bf16.mxu0 0
      %651 = vmatmul.mubr.bf16.gmra.mrb[0].mxu0 %v535
      %v652 = vpop.f32.mrb[0].mxu0
      %v653 = vadd.f32 0.0, %v652
      %v654 = vpop.f32.mrb[0].mxu0
      %v655 = vpop.f32.mrb[0].mxu0
      %v656 = vadd.f32 0.0, %v655
      %v657 = vpop.f32.mrb[0].mxu0
      %658 = vmatprep.mubr.bf16.mxu0 0
      %659 = vmatmul.mubr.bf16.gmra.mrb[0].mxu0 %v536
      %v660 = vpop.f32.mrb[0].mxu0
      %v661 = vadd.f32 0.0, %v660
      %v662 = vpop.f32.mrb[0].mxu0
      %v663 = vpop.f32.mrb[0].mxu0
      %v664 = vadd.f32 0.0, %v663
      %v665 = vpop.f32.mrb[0].mxu0
      %666 = vmatprep.mubr.bf16.mxu0 0
      %667 = vmatmul.mubr.bf16.gmra.mrb[0].mxu0 %v537
      %v668 = vpop.f32.mrb[0].mxu0
      %v669 = vadd.f32 0.0, %v668
      %v670 = vpop.f32.mrb[0].mxu0
      %v671 = vpop.f32.mrb[0].mxu0
      %v672 = vadd.f32 0.0, %v671
      %v673 = vpop.f32.mrb[0].mxu0
      %674 = vdwg.mxu0
      %s675 = smul.u32 %s25, 128
      %s676 = scalar_lea.vmem %s481, %s675 [#allocation2]
      %v677 = vld [vmem:[%s676] sm:$0xff]
      %v678 = vld [vmem:[%s676 + $0x8] sm:$0xff]
      %v679 = vld [vmem:[%s676 + $0x10] sm:$0xff]
      %v680 = vld [vmem:[%s676 + $0x18] sm:$0xff]
      %v681 = vld [vmem:[%s676 + $0x20] sm:$0xff]
      %v682 = vld [vmem:[%s676 + $0x28] sm:$0xff]
      %v683 = vld [vmem:[%s676 + $0x30] sm:$0xff]
      %v684 = vld [vmem:[%s676 + $0x38] sm:$0xff]
      %v685 = vld [vmem:[%s676 + $0x40] sm:$0xff]
      %v686 = vld [vmem:[%s676 + $0x48] sm:$0xff]
      %v687 = vld [vmem:[%s676 + $0x50] sm:$0xff]
      %v688 = vld [vmem:[%s676 + $0x58] sm:$0xff]
      %v689 = vld [vmem:[%s676 + $0x60] sm:$0xff]
      %v690 = vld [vmem:[%s676 + $0x68] sm:$0xff]
      %v691 = vld [vmem:[%s676 + $0x70] sm:$0xff]
      %v692 = vld [vmem:[%s676 + $0x78] sm:$0xff]
      %v693 = vadd.f32 %v677, %v613
      %v694 = vadd.f32 %v678, %v616
      %v695 = vadd.f32 %v679, %v621
      %v696 = vadd.f32 %v680, %v624
      %v697 = vadd.f32 %v681, %v629
      %v698 = vadd.f32 %v682, %v632
      %v699 = vadd.f32 %v683, %v637
      %v700 = vadd.f32 %v684, %v640
      %v701 = vadd.f32 %v685, %v645
      %v702 = vadd.f32 %v686, %v648
      %v703 = vadd.f32 %v687, %v653
      %v704 = vadd.f32 %v688, %v656
      %v705 = vadd.f32 %v689, %v661
      %v706 = vadd.f32 %v690, %v664
      %v707 = vadd.f32 %v691, %v669
      %v708 = vadd.f32 %v692, %v672
      %v709 = vld [vmem:[%s388] sm:$0xff]
      %v710 = vld [vmem:[%s388 + $0x8] sm:$0xff]
      %v711 = vld [vmem:[%s388 + $0x10] sm:$0xff]
      %v712 = vld [vmem:[%s388 + $0x18] sm:$0xff]
      %v713 = vld [vmem:[%s388 + $0x20] sm:$0xff]
      %v714 = vld [vmem:[%s388 + $0x28] sm:$0xff]
      %v715 = vld [vmem:[%s388 + $0x30] sm:$0xff]
      %v716 = vld [vmem:[%s388 + $0x38] sm:$0xff]
      %v717 = vld [vmem:[%s388 + $0x40] sm:$0xff]
      %v718 = vld [vmem:[%s388 + $0x48] sm:$0xff]
      %v719 = vld [vmem:[%s388 + $0x50] sm:$0xff]
      %v720 = vld [vmem:[%s388 + $0x58] sm:$0xff]
      %v721 = vld [vmem:[%s388 + $0x60] sm:$0xff]
      %v722 = vld [vmem:[%s388 + $0x68] sm:$0xff]
      %v723 = vld [vmem:[%s388 + $0x70] sm:$0xff]
      %v724 = vld [vmem:[%s388 + $0x78] sm:$0xff]
      %v725 = vld [vmem:[%s391] sm:$0x1]
      %v727 = vlaneseq
      %v728 = vshrl.u32 %v727, 7
      %v729 = vsub.s32 0, %v728
      %v730 = vrot.slane %v725, %v729
      %732 = vmatprep.subr.mxu0 0.0
      %733 = vmatpush1.msra.mxu0 %v709
      %734 = vmatprep.subr.mxu0 0.0
      %735 = vmatpush1.msra.mxu0 %v710
      %736 = vmatprep.subr.mxu0 0.0
      %737 = vmatpush1.msra.mxu0 %v711
      %738 = vmatprep.subr.mxu0 0.0
      %739 = vmatpush1.msra.mxu0 %v712
      %740 = vmatprep.subr.mxu0 0.0
      %741 = vmatpush1.msra.mxu0 %v713
      %742 = vmatprep.subr.mxu0 0.0
      %743 = vmatpush1.msra.mxu0 %v714
      %744 = vmatprep.subr.mxu0 0.0
      %745 = vmatpush1.msra.mxu0 %v715
      %746 = vmatprep.subr.mxu0 0.0
      %747 = vmatpush1.msra.mxu0 %v716
      %748 = vmatprep.subr.mxu0 0.0
      %749 = vmatpush1.msra.mxu0 %v717
      %750 = vmatprep.subr.mxu0 0.0
      %751 = vmatpush1.msra.mxu0 %v718
      %752 = vmatprep.subr.mxu0 0.0
      %753 = vmatpush1.msra.mxu0 %v719
      %754 = vmatprep.subr.mxu0 0.0
      %755 = vmatpush1.msra.mxu0 %v720
      %756 = vmatprep.subr.mxu0 0.0
      %757 = vmatpush1.msra.mxu0 %v721
      %758 = vmatprep.subr.mxu0 0.0
      %759 = vmatpush1.msra.mxu0 %v722
      %760 = vmatprep.subr.mxu0 0.0
      %761 = vmatpush1.msra.mxu0 %v723
      %762 = vmatprep.subr.mxu0 0.0
      %763 = vmatpush1.msra.mxu0 %v724
      %764 = vmatprep.subr.mxu0 0.0
      %765 = vmatpush1.msra.mxu0 0.0
      %766 = vmatprep.subr.mxu0 0.0
      %767 = vmatpush1.msra.mxu0 0.0
      %768 = vmatprep.subr.mxu0 0.0
      %769 = vmatpush1.msra.mxu0 0.0
      %770 = vmatprep.subr.mxu0 0.0
      %771 = vmatpush1.msra.mxu0 0.0
      %772 = vmatprep.subr.mxu0 0.0
      %773 = vmatpush1.msra.mxu0 0.0
      %774 = vmatprep.subr.mxu0 0.0
      %775 = vmatpush1.msra.mxu0 0.0
      %776 = vmatprep.subr.mxu0 0.0
      %777 = vmatpush1.msra.mxu0 0.0
      %778 = vmatprep.subr.mxu0 0.0
      %779 = vmatpush1.msra.mxu0 0.0
      %780 = vmatprep.subr.mxu0 0.0
      %781 = vmatpush1.msra.mxu0 0.0
      %782 = vmatprep.subr.mxu0 0.0
      %783 = vmatpush1.msra.mxu0 0.0
      %784 = vmatprep.subr.mxu0 0.0
      %785 = vmatpush1.msra.mxu0 0.0
      %786 = vmatprep.subr.mxu0 0.0
      %787 = vmatpush1.msra.mxu0 0.0
      %788 = vmatprep.subr.mxu0 0.0
      %789 = vmatpush1.msra.mxu0 0.0
      %790 = vmatprep.subr.mxu0 0.0
      %791 = vmatpush1.msra.mxu0 0.0
      %792 = vmatprep.subr.mxu0 0.0
      %793 = vmatpush1.msra.mxu0 0.0
      %794 = vmatprep.subr.mxu0 0.0
      %795 = vmatpush1.msra.mxu0 0.0
      %796 = vmatprep.mubr.f32.mxu0 0.0
      %797 = vmatmul.mubr.f32.gmra.mrb[0].mxu0 %v693
      %v798 = vpop.f32.mrb[0].mxu0
      %v799 = vadd.f32 %v730, %v798
      %v800 = vpop.f32.mrb[0].mxu0
      %801 = vmatprep.mubr.f32.mxu0 0.0
      %802 = vmatmul.mubr.f32.gmra.mrb[0].mxu0 %v694
      %v803 = vpop.f32.mrb[0].mxu0
      %v804 = vadd.f32 %v730, %v803
      %v805 = vpop.f32.mrb[0].mxu0
      %806 = vmatprep.mubr.f32.mxu0 0.0
      %807 = vmatmul.mubr.f32.gmra.mrb[0].mxu0 %v695
      %v808 = vpop.f32.mrb[0].mxu0
      %v809 = vadd.f32 %v730, %v808
      %v810 = vpop.f32.mrb[0].mxu0
      %811 = vmatprep.mubr.f32.mxu0 0.0
      %812 = vmatmul.mubr.f32.gmra.mrb[0].mxu0 %v696
      %v813 = vpop.f32.mrb[0].mxu0
      %v814 = vadd.f32 %v730, %v813
      %v815 = vpop.f32.mrb[0].mxu0
      %816 = vmatprep.mubr.f32.mxu0 0.0
      %817 = vmatmul.mubr.f32.gmra.mrb[0].mxu0 %v697
      %v818 = vpop.f32.mrb[0].mxu0
      %v819 = vadd.f32 %v730, %v818
      %v820 = vpop.f32.mrb[0].mxu0
      %821 = vmatprep.mubr.f32.mxu0 0.0
      %822 = vmatmul.mubr.f32.gmra.mrb[0].mxu0 %v698
      %v823 = vpop.f32.mrb[0].mxu0
      %v824 = vadd.f32 %v730, %v823
      %v825 = vpop.f32.mrb[0].mxu0
      %826 = vmatprep.mubr.f32.mxu0 0.0
      %827 = vmatmul.mubr.f32.gmra.mrb[0].mxu0 %v699
      %v828 = vpop.f32.mrb[0].mxu0
      %v829 = vadd.f32 %v730, %v828
      %v830 = vpop.f32.mrb[0].mxu0
      %831 = vmatprep.mubr.f32.mxu0 0.0
      %832 = vmatmul.mubr.f32.gmra.mrb[0].mxu0 %v700
      %v833 = vpop.f32.mrb[0].mxu0
      %v834 = vadd.f32 %v730, %v833
      %v835 = vpop.f32.mrb[0].mxu0
      %836 = vmatprep.mubr.f32.mxu0 0.0
      %837 = vmatmul.mubr.f32.gmra.mrb[0].mxu0 %v701
      %v838 = vpop.f32.mrb[0].mxu0
      %v839 = vadd.f32 %v730, %v838
      %v840 = vpop.f32.mrb[0].mxu0
      %841 = vmatprep.mubr.f32.mxu0 0.0
      %842 = vmatmul.mubr.f32.gmra.mrb[0].mxu0 %v702
      %v843 = vpop.f32.mrb[0].mxu0
      %v844 = vadd.f32 %v730, %v843
      %v845 = vpop.f32.mrb[0].mxu0
      %846 = vmatprep.mubr.f32.mxu0 0.0
      %847 = vmatmul.mubr.f32.gmra.mrb[0].mxu0 %v703
      %v848 = vpop.f32.mrb[0].mxu0
      %v849 = vadd.f32 %v730, %v848
      %v850 = vpop.f32.mrb[0].mxu0
      %851 = vmatprep.mubr.f32.mxu0 0.0
      %852 = vmatmul.mubr.f32.gmra.mrb[0].mxu0 %v704
      %v853 = vpop.f32.mrb[0].mxu0
      %v854 = vadd.f32 %v730, %v853
      %v855 = vpop.f32.mrb[0].mxu0
      %856 = vmatprep.mubr.f32.mxu0 0.0
      %857 = vmatmul.mubr.f32.gmra.mrb[0].mxu0 %v705
      %v858 = vpop.f32.mrb[0].mxu0
      %v859 = vadd.f32 %v730, %v858
      %v860 = vpop.f32.mrb[0].mxu0
      %861 = vmatprep.mubr.f32.mxu0 0.0
      %862 = vmatmul.mubr.f32.gmra.mrb[0].mxu0 %v706
      %v863 = vpop.f32.mrb[0].mxu0
      %v864 = vadd.f32 %v730, %v863
      %v865 = vpop.f32.mrb[0].mxu0
      %866 = vmatprep.mubr.f32.mxu0 0.0
      %867 = vmatmul.mubr.f32.gmra.mrb[0].mxu0 %v707
      %v868 = vpop.f32.mrb[0].mxu0
      %v869 = vadd.f32 %v730, %v868
      %v870 = vpop.f32.mrb[0].mxu0
      %871 = vmatprep.mubr.f32.mxu0 0.0
      %872 = vmatmul.mubr.f32.gmra.mrb[0].mxu0 %v708
      %v873 = vpop.f32.mrb[0].mxu0
      %v874 = vadd.f32 %v730, %v873
      %v875 = vpop.f32.mrb[0].mxu0
      %876 = vdwg.mxu0
      %v877 = vmax.f32 %v799, 0.0
      %v878 = vmax.f32 %v804, 0.0
      %v879 = vmax.f32 %v809, 0.0
      %v880 = vmax.f32 %v814, 0.0
      %v881 = vmax.f32 %v819, 0.0
      %v882 = vmax.f32 %v824, 0.0
      %v883 = vmax.f32 %v829, 0.0
      %v884 = vmax.f32 %v834, 0.0
      %v885 = vmax.f32 %v839, 0.0
      %v886 = vmax.f32 %v844, 0.0
      %v887 = vmax.f32 %v849, 0.0
      %v888 = vmax.f32 %v854, 0.0
      %v889 = vmax.f32 %v859, 0.0
      %v890 = vmax.f32 %v864, 0.0
      %v891 = vmax.f32 %v869, 0.0
      %v892 = vmax.f32 %v874, 0.0
      %v893 = vld [vmem:[%s396] sm:$0xff]
      %v894 = vld [vmem:[%s396 + $0x8] sm:$0xff]
      %v895 = vld [vmem:[%s396 + $0x10] sm:$0xff]
      %v896 = vld [vmem:[%s396 + $0x18] sm:$0xff]
      %v897 = vld [vmem:[%s396 + $0x20] sm:$0xff]
      %v898 = vld [vmem:[%s396 + $0x28] sm:$0xff]
      %v899 = vld [vmem:[%s396 + $0x30] sm:$0xff]
      %v900 = vld [vmem:[%s396 + $0x38] sm:$0xff]
      %v901 = vld [vmem:[%s396 + $0x40] sm:$0xff]
      %v902 = vld [vmem:[%s396 + $0x48] sm:$0xff]
      %v903 = vld [vmem:[%s396 + $0x50] sm:$0xff]
      %v904 = vld [vmem:[%s396 + $0x58] sm:$0xff]
      %v905 = vld [vmem:[%s396 + $0x60] sm:$0xff]
      %v906 = vld [vmem:[%s396 + $0x68] sm:$0xff]
      %v907 = vld [vmem:[%s396 + $0x70] sm:$0xff]
      %v908 = vld [vmem:[%s396 + $0x78] sm:$0xff]
      %v909 = vld [vmem:[%s399] sm:$0x1]
      %v911 = vlaneseq
      %v912 = vshrl.u32 %v911, 7
      %v913 = vsub.s32 0, %v912
      %v914 = vrot.slane %v909, %v913
      %916 = vmatprep.subr.mxu0 0.0
      %917 = vmatpush1.msra.mxu0 %v893
      %918 = vmatprep.subr.mxu0 0.0
      %919 = vmatpush1.msra.mxu0 %v894
      %920 = vmatprep.subr.mxu0 0.0
      %921 = vmatpush1.msra.mxu0 %v895
      %922 = vmatprep.subr.mxu0 0.0
      %923 = vmatpush1.msra.mxu0 %v896
      %924 = vmatprep.subr.mxu0 0.0
      %925 = vmatpush1.msra.mxu0 %v897
      %926 = vmatprep.subr.mxu0 0.0
      %927 = vmatpush1.msra.mxu0 %v898
      %928 = vmatprep.subr.mxu0 0.0
      %929 = vmatpush1.msra.mxu0 %v899
      %930 = vmatprep.subr.mxu0 0.0
      %931 = vmatpush1.msra.mxu0 %v900
      %932 = vmatprep.subr.mxu0 0.0
      %933 = vmatpush1.msra.mxu0 %v901
      %934 = vmatprep.subr.mxu0 0.0
      %935 = vmatpush1.msra.mxu0 %v902
      %936 = vmatprep.subr.mxu0 0.0
      %937 = vmatpush1.msra.mxu0 %v903
      %938 = vmatprep.subr.mxu0 0.0
      %939 = vmatpush1.msra.mxu0 %v904
      %940 = vmatprep.subr.mxu0 0.0
      %941 = vmatpush1.msra.mxu0 %v905
      %942 = vmatprep.subr.mxu0 0.0
      %943 = vmatpush1.msra.mxu0 %v906
      %944 = vmatprep.subr.mxu0 0.0
      %945 = vmatpush1.msra.mxu0 %v907
      %946 = vmatprep.subr.mxu0 0.0
      %947 = vmatpush1.msra.mxu0 %v908
      %948 = vmatprep.subr.mxu0 0.0
      %949 = vmatpush1.msra.mxu0 0.0
      %950 = vmatprep.subr.mxu0 0.0
      %951 = vmatpush1.msra.mxu0 0.0
      %952 = vmatprep.subr.mxu0 0.0
      %953 = vmatpush1.msra.mxu0 0.0
      %954 = vmatprep.subr.mxu0 0.0
      %955 = vmatpush1.msra.mxu0 0.0
      %956 = vmatprep.subr.mxu0 0.0
      %957 = vmatpush1.msra.mxu0 0.0
      %958 = vmatprep.subr.mxu0 0.0
      %959 = vmatpush1.msra.mxu0 0.0
      %960 = vmatprep.subr.mxu0 0.0
      %961 = vmatpush1.msra.mxu0 0.0
      %962 = vmatprep.subr.mxu0 0.0
      %963 = vmatpush1.msra.mxu0 0.0
      %964 = vmatprep.subr.mxu0 0.0
      %965 = vmatpush1.msra.mxu0 0.0
      %966 = vmatprep.subr.mxu0 0.0
      %967 = vmatpush1.msra.mxu0 0.0
      %968 = vmatprep.subr.mxu0 0.0
      %969 = vmatpush1.msra.mxu0 0.0
      %970 = vmatprep.subr.mxu0 0.0
      %971 = vmatpush1.msra.mxu0 0.0
      %972 = vmatprep.subr.mxu0 0.0
      %973 = vmatpush1.msra.mxu0 0.0
      %974 = vmatprep.subr.mxu0 0.0
      %975 = vmatpush1.msra.mxu0 0.0
      %976 = vmatprep.subr.mxu0 0.0
      %977 = vmatpush1.msra.mxu0 0.0
      %978 = vmatprep.subr.mxu0 0.0
      %979 = vmatpush1.msra.mxu0 0.0
      %980 = vmatprep.mubr.f32.mxu0 0.0
      %981 = vmatmul.mubr.f32.gmra.mrb[0].mxu0 %v877
      %v982 = vpop.f32.mrb[0].mxu0
      %v983 = vadd.f32 %v914, %v982
      %v984 = vpop.f32.mrb[0].mxu0
      %985 = vmatprep.mubr.f32.mxu0 0.0
      %986 = vmatmul.mubr.f32.gmra.mrb[0].mxu0 %v878
      %v987 = vpop.f32.mrb[0].mxu0
      %v988 = vadd.f32 %v914, %v987
      %v989 = vpop.f32.mrb[0].mxu0
      %990 = vmatprep.mubr.f32.mxu0 0.0
      %991 = vmatmul.mubr.f32.gmra.mrb[0].mxu0 %v879
      %v992 = vpop.f32.mrb[0].mxu0
      %v993 = vadd.f32 %v914, %v992
      %v994 = vpop.f32.mrb[0].mxu0
      %995 = vmatprep.mubr.f32.mxu0 0.0
      %996 = vmatmul.mubr.f32.gmra.mrb[0].mxu0 %v880
      %v997 = vpop.f32.mrb[0].mxu0
      %v998 = vadd.f32 %v914, %v997
      %v999 = vpop.f32.mrb[0].mxu0
      %1000 = vmatprep.mubr.f32.mxu0 0.0
      %1001 = vmatmul.mubr.f32.gmra.mrb[0].mxu0 %v881
      %v1002 = vpop.f32.mrb[0].mxu0
      %v1003 = vadd.f32 %v914, %v1002
      %v1004 = vpop.f32.mrb[0].mxu0
      %1005 = vmatprep.mubr.f32.mxu0 0.0
      %1006 = vmatmul.mubr.f32.gmra.mrb[0].mxu0 %v882
      %v1007 = vpop.f32.mrb[0].mxu0
      %v1008 = vadd.f32 %v914, %v1007
      %v1009 = vpop.f32.mrb[0].mxu0
      %1010 = vmatprep.mubr.f32.mxu0 0.0
      %1011 = vmatmul.mubr.f32.gmra.mrb[0].mxu0 %v883
      %v1012 = vpop.f32.mrb[0].mxu0
      %v1013 = vadd.f32 %v914, %v1012
      %v1014 = vpop.f32.mrb[0].mxu0
      %1015 = vmatprep.mubr.f32.mxu0 0.0
      %1016 = vmatmul.mubr.f32.gmra.mrb[0].mxu0 %v884
      %v1017 = vpop.f32.mrb[0].mxu0
      %v1018 = vadd.f32 %v914, %v1017
      %v1019 = vpop.f32.mrb[0].mxu0
      %1020 = vmatprep.mubr.f32.mxu0 0.0
      %1021 = vmatmul.mubr.f32.gmra.mrb[0].mxu0 %v885
      %v1022 = vpop.f32.mrb[0].mxu0
      %v1023 = vadd.f32 %v914, %v1022
      %v1024 = vpop.f32.mrb[0].mxu0
      %1025 = vmatprep.mubr.f32.mxu0 0.0
      %1026 = vmatmul.mubr.f32.gmra.mrb[0].mxu0 %v886
      %v1027 = vpop.f32.mrb[0].mxu0
      %v1028 = vadd.f32 %v914, %v1027
      %v1029 = vpop.f32.mrb[0].mxu0
      %1030 = vmatprep.mubr.f32.mxu0 0.0
      %1031 = vmatmul.mubr.f32.gmra.mrb[0].mxu0 %v887
      %v1032 = vpop.f32.mrb[0].mxu0
      %v1033 = vadd.f32 %v914, %v1032
      %v1034 = vpop.f32.mrb[0].mxu0
      %1035 = vmatprep.mubr.f32.mxu0 0.0
      %1036 = vmatmul.mubr.f32.gmra.mrb[0].mxu0 %v888
      %v1037 = vpop.f32.mrb[0].mxu0
      %v1038 = vadd.f32 %v914, %v1037
      %v1039 = vpop.f32.mrb[0].mxu0
      %1040 = vmatprep.mubr.f32.mxu0 0.0
      %1041 = vmatmul.mubr.f32.gmra.mrb[0].mxu0 %v889
      %v1042 = vpop.f32.mrb[0].mxu0
      %v1043 = vadd.f32 %v914, %v1042
      %v1044 = vpop.f32.mrb[0].mxu0
      %1045 = vmatprep.mubr.f32.mxu0 0.0
      %1046 = vmatmul.mubr.f32.gmra.mrb[0].mxu0 %v890
      %v1047 = vpop.f32.mrb[0].mxu0
      %v1048 = vadd.f32 %v914, %v1047
      %v1049 = vpop.f32.mrb[0].mxu0
      %1050 = vmatprep.mubr.f32.mxu0 0.0
      %1051 = vmatmul.mubr.f32.gmra.mrb[0].mxu0 %v891
      %v1052 = vpop.f32.mrb[0].mxu0
      %v1053 = vadd.f32 %v914, %v1052
      %v1054 = vpop.f32.mrb[0].mxu0
      %1055 = vmatprep.mubr.f32.mxu0 0.0
      %1056 = vmatmul.mubr.f32.gmra.mrb[0].mxu0 %v892
      %v1057 = vpop.f32.mrb[0].mxu0
      %v1058 = vadd.f32 %v914, %v1057
      %v1059 = vpop.f32.mrb[0].mxu0
      %1060 = vdwg.mxu0
      %v1061 = vmax.f32 %v983, 0.0
      %v1062 = vmax.f32 %v988, 0.0
      %v1063 = vmax.f32 %v993, 0.0
      %v1064 = vmax.f32 %v998, 0.0
      %v1065 = vmax.f32 %v1003, 0.0
      %v1066 = vmax.f32 %v1008, 0.0
      %v1067 = vmax.f32 %v1013, 0.0
      %v1068 = vmax.f32 %v1018, 0.0
      %v1069 = vmax.f32 %v1023, 0.0
      %v1070 = vmax.f32 %v1028, 0.0
      %v1071 = vmax.f32 %v1033, 0.0
      %v1072 = vmax.f32 %v1038, 0.0
      %v1073 = vmax.f32 %v1043, 0.0
      %v1074 = vmax.f32 %v1048, 0.0
      %v1075 = vmax.f32 %v1053, 0.0
      %v1076 = vmax.f32 %v1058, 0.0
      %s1077 = smul.u32 %s425, 128
      %s1078 = scalar_lea.vmem [#allocation2], %s1077
      %s1079 = scalar_lea.vmem %s1078, %s675 [#allocation2]
      %1080 = vst [vmem:[%s1079] sm:$0xff] %v1061
      %1081 = vst [vmem:[%s1079 + $0x8] sm:$0xff] %v1062
      %1082 = vst [vmem:[%s1079 + $0x10] sm:$0xff] %v1063
      %1083 = vst [vmem:[%s1079 + $0x18] sm:$0xff] %v1064
      %1084 = vst [vmem:[%s1079 + $0x20] sm:$0xff] %v1065
      %1085 = vst [vmem:[%s1079 + $0x28] sm:$0xff] %v1066
      %1086 = vst [vmem:[%s1079 + $0x30] sm:$0xff] %v1067
      %1087 = vst [vmem:[%s1079 + $0x38] sm:$0xff] %v1068
      %1088 = vst [vmem:[%s1079 + $0x40] sm:$0xff] %v1069
      %1089 = vst [vmem:[%s1079 + $0x48] sm:$0xff] %v1070
      %1090 = vst [vmem:[%s1079 + $0x50] sm:$0xff] %v1071
      %1091 = vst [vmem:[%s1079 + $0x58] sm:$0xff] %v1072
      %1092 = vst [vmem:[%s1079 + $0x60] sm:$0xff] %v1073
      %1093 = vst [vmem:[%s1079 + $0x68] sm:$0xff] %v1074
      %1094 = vst [vmem:[%s1079 + $0x70] sm:$0xff] %v1075
      %1095 = vst [vmem:[%s1079 + $0x78] sm:$0xff] %v1076
      %p1096 = scmp.eq.s32.totalorder %s24, 2
      %p1097 = pnand %p1096, %p427
      %p1098 = pneg %p1097
      // Predicated region
      $region61: #{gin_forward.1} parent=55 // pred_check
        _
      $region62: #{gin_forward.1} parent=55 // pred_check_branch
        %1100 = sbr.rel (%p1097) target = $region64
      $region63: #{gin_forward.1} parent=55 // pred_region
        %v1101 = vld [vmem:[%s6] sm:$0xff]
        %v1102 = vld [vmem:[%s1078] sm:$0xff]
        %v1103 = vld [vmem:[%s1078 + $0x8] sm:$0xff]
        %v1104 = vld [vmem:[%s1078 + $0x10] sm:$0xff]
        %v1105 = vld [vmem:[%s1078 + $0x18] sm:$0xff]
        %v1106 = vld [vmem:[%s1078 + $0x20] sm:$0xff]
        %v1107 = vld [vmem:[%s1078 + $0x28] sm:$0xff]
        %v1108 = vld [vmem:[%s1078 + $0x30] sm:$0xff]
        %v1109 = vld [vmem:[%s1078 + $0x38] sm:$0xff]
        %v1110 = vld [vmem:[%s1078 + $0x40] sm:$0xff]
        %v1111 = vld [vmem:[%s1078 + $0x48] sm:$0xff]
        %v1112 = vld [vmem:[%s1078 + $0x50] sm:$0xff]
        %v1113 = vld [vmem:[%s1078 + $0x58] sm:$0xff]
        %v1114 = vld [vmem:[%s1078 + $0x60] sm:$0xff]
        %v1115 = vld [vmem:[%s1078 + $0x68] sm:$0xff]
        %v1116 = vld [vmem:[%s1078 + $0x70] sm:$0xff]
        %v1117 = vld [vmem:[%s1078 + $0x78] sm:$0xff]
        %1118 = vmatprep.subr.mxu0 0.0
        %1119 = vmatpush1.msra.mxu0 %v1102
        %1120 = vmatprep.subr.mxu0 0.0
        %1121 = vmatpush1.msra.mxu0 %v1103
        %1122 = vmatprep.subr.mxu0 0.0
        %1123 = vmatpush1.msra.mxu0 %v1104
        %1124 = vmatprep.subr.mxu0 0.0
        %1125 = vmatpush1.msra.mxu0 %v1105
        %1126 = vmatprep.subr.mxu0 0.0
        %1127 = vmatpush1.msra.mxu0 %v1106
        %1128 = vmatprep.subr.mxu0 0.0
        %1129 = vmatpush1.msra.mxu0 %v1107
        %1130 = vmatprep.subr.mxu0 0.0
        %1131 = vmatpush1.msra.mxu0 %v1108
        %1132 = vmatprep.subr.mxu0 0.0
        %1133 = vmatpush1.msra.mxu0 %v1109
        %1134 = vmatprep.subr.mxu0 0.0
        %1135 = vmatpush1.msra.mxu0 %v1110
        %1136 = vmatprep.subr.mxu0 0.0
        %1137 = vmatpush1.msra.mxu0 %v1111
        %1138 = vmatprep.subr.mxu0 0.0
        %1139 = vmatpush1.msra.mxu0 %v1112
        %1140 = vmatprep.subr.mxu0 0.0
        %1141 = vmatpush1.msra.mxu0 %v1113
        %1142 = vmatprep.subr.mxu0 0.0
        %1143 = vmatpush1.msra.mxu0 %v1114
        %1144 = vmatprep.subr.mxu0 0.0
        %1145 = vmatpush1.msra.mxu0 %v1115
        %1146 = vmatprep.subr.mxu0 0.0
        %1147 = vmatpush1.msra.mxu0 %v1116
        %1148 = vmatprep.subr.mxu0 0.0
        %1149 = vmatpush1.msra.mxu0 %v1117
        %1150 = vmatprep.subr.mxu0 0.0
        %1151 = vmatpush1.msra.mxu0 0.0
        %1152 = vmatprep.subr.mxu0 0.0
        %1153 = vmatpush1.msra.mxu0 0.0
        %1154 = vmatprep.subr.mxu0 0.0
        %1155 = vmatpush1.msra.mxu0 0.0
        %1156 = vmatprep.subr.mxu0 0.0
        %1157 = vmatpush1.msra.mxu0 0.0
        %1158 = vmatprep.subr.mxu0 0.0
        %1159 = vmatpush1.msra.mxu0 0.0
        %1160 = vmatprep.subr.mxu0 0.0
        %1161 = vmatpush1.msra.mxu0 0.0
        %1162 = vmatprep.subr.mxu0 0.0
        %1163 = vmatpush1.msra.mxu0 0.0
        %1164 = vmatprep.subr.mxu0 0.0
        %1165 = vmatpush1.msra.mxu0 0.0
        %1166 = vmatprep.subr.mxu0 0.0
        %1167 = vmatpush1.msra.mxu0 0.0
        %1168 = vmatprep.subr.mxu0 0.0
        %1169 = vmatpush1.msra.mxu0 0.0
        %1170 = vmatprep.subr.mxu0 0.0
        %1171 = vmatpush1.msra.mxu0 0.0
        %1172 = vmatprep.subr.mxu0 0.0
        %1173 = vmatpush1.msra.mxu0 0.0
        %1174 = vmatprep.subr.mxu0 0.0
        %1175 = vmatpush1.msra.mxu0 0.0
        %1176 = vmatprep.subr.mxu0 0.0
        %1177 = vmatpush1.msra.mxu0 0.0
        %1178 = vmatprep.subr.mxu0 0.0
        %1179 = vmatpush1.msra.mxu0 0.0
        %1180 = vmatprep.subr.mxu0 0.0
        %1181 = vmatpush1.msra.mxu0 0.0
        %1182 = vmatprep.mubr.f32.mxu0 0.0
        %1183 = vmatmul.mubr.f32.gmra.mrb[0].mxu0 %v1101
        %v1184 = vpop.f32.mrb[0].mxu0
        %v1185 = vadd.f32 0.0, %v1184
        %v1186 = vpop.f32.mrb[0].mxu0
        %1187 = vdwg.mxu0
        %v1188 = vld [vmem:[%s7] sm:$0xff]
        %v1189 = vld [vmem:[%s7 + $0x8] sm:$0xff]
        %v1190 = vld [vmem:[%s7 + $0x10] sm:$0xff]
        %v1191 = vld [vmem:[%s7 + $0x18] sm:$0xff]
        %v1192 = vld [vmem:[%s7 + $0x20] sm:$0xff]
        %v1193 = vld [vmem:[%s7 + $0x28] sm:$0xff]
        %v1194 = vld [vmem:[%s7 + $0x30] sm:$0xff]
        %v1195 = vld [vmem:[%s7 + $0x38] sm:$0xff]
        %v1196 = vld [vmem:[%s7 + $0x40] sm:$0xff]
        %v1197 = vld [vmem:[%s7 + $0x48] sm:$0xff]
        %v1198 = vld [vmem:[%s7 + $0x50] sm:$0xff]
        %v1199 = vld [vmem:[%s7 + $0x58] sm:$0xff]
        %v1200 = vld [vmem:[%s7 + $0x60] sm:$0xff]
        %v1201 = vld [vmem:[%s7 + $0x68] sm:$0xff]
        %v1202 = vld [vmem:[%s7 + $0x70] sm:$0xff]
        %v1203 = vld [vmem:[%s7 + $0x78] sm:$0xff]
        %v1204 = vld [vmem:[%s8] sm:$0x1]
        %v1206 = vlaneseq
        %v1207 = vshrl.u32 %v1206, 7
        %v1208 = vsub.s32 0, %v1207
        %v1209 = vrot.slane %v1204, %v1208
        %1211 = vmatprep.subr.mxu0 0.0
        %1212 = vmatpush1.msra.mxu0 %v1188
        %1213 = vmatprep.subr.mxu0 0.0
        %1214 = vmatpush1.msra.mxu0 %v1189
        %1215 = vmatprep.subr.mxu0 0.0
        %1216 = vmatpush1.msra.mxu0 %v1190
        %1217 = vmatprep.subr.mxu0 0.0
        %1218 = vmatpush1.msra.mxu0 %v1191
        %1219 = vmatprep.subr.mxu0 0.0
        %1220 = vmatpush1.msra.mxu0 %v1192
        %1221 = vmatprep.subr.mxu0 0.0
        %1222 = vmatpush1.msra.mxu0 %v1193
        %1223 = vmatprep.subr.mxu0 0.0
        %1224 = vmatpush1.msra.mxu0 %v1194
        %1225 = vmatprep.subr.mxu0 0.0
        %1226 = vmatpush1.msra.mxu0 %v1195
        %1227 = vmatprep.subr.mxu0 0.0
        %1228 = vmatpush1.msra.mxu0 %v1196
        %1229 = vmatprep.subr.mxu0 0.0
        %1230 = vmatpush1.msra.mxu0 %v1197
        %1231 = vmatprep.subr.mxu0 0.0
        %1232 = vmatpush1.msra.mxu0 %v1198
        %1233 = vmatprep.subr.mxu0 0.0
        %1234 = vmatpush1.msra.mxu0 %v1199
        %1235 = vmatprep.subr.mxu0 0.0
        %1236 = vmatpush1.msra.mxu0 %v1200
        %1237 = vmatprep.subr.mxu0 0.0
        %1238 = vmatpush1.msra.mxu0 %v1201
        %1239 = vmatprep.subr.mxu0 0.0
        %1240 = vmatpush1.msra.mxu0 %v1202
        %1241 = vmatprep.subr.mxu0 0.0
        %1242 = vmatpush1.msra.mxu0 %v1203
        %1243 = vmatprep.subr.mxu0 0.0
        %1244 = vmatpush1.msra.mxu0 0.0
        %1245 = vmatprep.subr.mxu0 0.0
        %1246 = vmatpush1.msra.mxu0 0.0
        %1247 = vmatprep.subr.mxu0 0.0
        %1248 = vmatpush1.msra.mxu0 0.0
        %1249 = vmatprep.subr.mxu0 0.0
        %1250 = vmatpush1.msra.mxu0 0.0
        %1251 = vmatprep.subr.mxu0 0.0
        %1252 = vmatpush1.msra.mxu0 0.0
        %1253 = vmatprep.subr.mxu0 0.0
        %1254 = vmatpush1.msra.mxu0 0.0
        %1255 = vmatprep.subr.mxu0 0.0
        %1256 = vmatpush1.msra.mxu0 0.0
        %1257 = vmatprep.subr.mxu0 0.0
        %1258 = vmatpush1.msra.mxu0 0.0
        %1259 = vmatprep.subr.mxu0 0.0
        %1260 = vmatpush1.msra.mxu0 0.0
        %1261 = vmatprep.subr.mxu0 0.0
        %1262 = vmatpush1.msra.mxu0 0.0
        %1263 = vmatprep.subr.mxu0 0.0
        %1264 = vmatpush1.msra.mxu0 0.0
        %1265 = vmatprep.subr.mxu0 0.0
        %1266 = vmatpush1.msra.mxu0 0.0
        %1267 = vmatprep.subr.mxu0 0.0
        %1268 = vmatpush1.msra.mxu0 0.0
        %1269 = vmatprep.subr.mxu0 0.0
        %1270 = vmatpush1.msra.mxu0 0.0
        %1271 = vmatprep.subr.mxu0 0.0
        %1272 = vmatpush1.msra.mxu0 0.0
        %1273 = vmatprep.subr.mxu0 0.0
        %1274 = vmatpush1.msra.mxu0 0.0
        %1275 = vmatprep.mubr.f32.mxu0 0.0
        %1276 = vmatmul.mubr.f32.gmra.mrb[0].mxu0 %v1185
        %v1277 = vpop.f32.mrb[0].mxu0
        %v1278 = vadd.f32 %v1209, %v1277
        %v1279 = vpop.f32.mrb[0].mxu0
        %1280 = vdwg.mxu0
        %1281 = vst [vmem:[%s9] sm:$0xff] %v1278
      $region64: #{gin_forward.1} parent=55 // pred_fallthru
        _
      // Predicated region
      $region65: #{gin_forward.1} parent=55 // pred_check
        %p1282 = pneg %p259
      $region66: #{gin_forward.1} parent=55 // pred_check_branch
        %1284 = sbr.rel (%p1282) target = $region68
      $region67: #{gin_forward.1} parent=55 // pred_region
        _
      $region68: #{gin_forward.1} parent=55 // pred_fallthru
        _
      // Predicated region
      $region69: #{gin_forward.1} parent=55 // pred_check
        %p1285 = pneg %p259
      $region70: #{gin_forward.1} parent=55 // pred_check_branch
        %1287 = sbr.rel (%p1285) target = $region72
      $region71: #{gin_forward.1} parent=55 // pred_region
        _
      $region72: #{gin_forward.1} parent=55 // pred_fallthru
        _
    $region56: #{gin_forward.1} parent=5 // pred_fallthru
      _
    %p1288 = scmp.le.s32.totalorder 2, %s15
    // Predicated region
    $region73: #{gin_forward.1} parent=5 // pred_check
      %p1289 = pneg %p1288
    $region74: #{gin_forward.1} parent=5 // pred_check_branch
      %1291 = sbr.rel (%p1289) target = $region76
    $region75: #{gin_forward.1} parent=5 // pred_region
      %s1292 = ssub.s32 %s15, 2
    $region76: #{gin_forward.1} parent=5 // pred_fallthru
      _
  $region6: #{gin_forward.1} parent=0 // loop_footer
    %s19 = sadd.s32 1, %s15
  $region7: #{gin_forward.1} parent=0 // loop_footer_branch
    %14 = sbr.rel target = $region3
  $region8: #{gin_forward.1} parent=0 // loop_exit
    _

</llo_original>
